<compile_context>
chip_gen: v6e
topology: v6e:2x2x1
jax: 0.10.0
libtpu: 0.0.40
codegen_flags: <defaults>
</compile_context>

<pallas_src>
import functools

import jax
import jax.numpy as jnp
from jax.experimental import pallas as pl
from jax.experimental.pallas import tpu as pltpu


def _round_up(x, m):
    return (x + m - 1) // m * m


# ---------------------------------------------------------------------------
# Pallas kernel: one grid step == one batch element of one conv layer.
#   p_ref : (1, P, Kp)  bf16 im2col patches (P = OH*OW, Kp = kh*kw*Cin padded to 128)
#   w_ref : (Kp, Cp)    bf16 reshaped conv weights (Cp = Cout padded to 128)
#   b_ref : (1, Cp)     f32 bias
#   o_ref : (1, P, Cp)  f32 output (lane-dense: Cp % 128 == 0)
# Fuses: MXU matmul (f32 accumulate) + bias + LeakyReLU(0.2)
#        + InstanceNorm2d (per-(N,C) stats over spatial axis, biased variance,
#          eps=1e-5, no affine), using single-pass sum / sum^2 statistics.
# Zero-padded K rows / Cout columns are inert: padded channels stay exactly 0
# through bias / LeakyReLU / IN and are sliced off outside the kernel.
# ---------------------------------------------------------------------------
def _conv_block_kernel(p_ref, w_ref, b_ref, o_ref, *, slope, use_in, eps, inv_p):
    p = p_ref[0]                       # (P, Kp)  bf16
    w = w_ref[...]                     # (Kp, Cp) bf16
    b = b_ref[...]                     # (1, Cp)  f32
    y = jnp.dot(p, w, preferred_element_type=jnp.float32) + b
    if slope is not None:              # LeakyReLU(negative_slope=slope)
        y = jnp.where(y >= 0.0, y, slope * y)
    if use_in:                         # InstanceNorm2d, single-pass stats in f32
        s = jnp.sum(y, axis=0, keepdims=True)        # (1, Cp)
        ss = jnp.sum(y * y, axis=0, keepdims=True)   # (1, Cp)
        mean = s * inv_p
        var = jnp.maximum(ss * inv_p - mean * mean, 0.0)
        y = (y - mean) * jax.lax.rsqrt(var + eps)
    o_ref[0] = y.astype(o_ref.dtype)


def _im2col_nhwc(x, k, stride, pad):
    """x: (N, H, W, C) -> patches (N, OH*OW, k*k*C) ordered (di, dj, c)."""
    N, H, W, C = x.shape
    xp = jnp.pad(x, ((0, 0), (pad, pad), (pad, pad), (0, 0)))
    Hp, Wp = H + 2 * pad, W + 2 * pad
    OH = (Hp - k) // stride + 1
    OW = (Wp - k) // stride + 1
    cols = []
    for di in range(k):
        for dj in range(k):
            cols.append(xp[:, di:di + stride * OH:stride,
                           dj:dj + stride * OW:stride, :])      # (N, OH, OW, C)
    patches = jnp.stack(cols, axis=3)                           # (N, OH, OW, k*k, C)
    return patches.reshape(N, OH * OW, k * k * C), OH, OW


def conv_layer(x, w, b, *, stride, pad, slope, use_in, eps=1e-5):
    """x: (N, H, W, Cin) NHWC; w: (Cout, Cin, kh, kw) PyTorch layout; b: (Cout,)."""
    Cout, Cin, kh, kw = w.shape
    patches, OH, OW = _im2col_nhwc(x, kh, stride, pad)
    N, P, K = patches.shape

    # Pad contraction depth and output channels to multiples of 128 so the MXU
    # sees full columns and the output store path is lane-dense (unmasked vst).
    Kp = _round_up(K, 128)
    Cp = _round_up(Cout, 128)

    # reorder weights to match (di, dj, c) patch ordering -> (K, Cout), then pad.
    w2 = jnp.transpose(w, (2, 3, 1, 0)).reshape(K, Cout)
    w2 = jnp.pad(w2, ((0, Kp - K), (0, Cp - Cout))).astype(jnp.bfloat16)
    b2 = jnp.pad(b, (0, Cp - Cout)).reshape(1, Cp).astype(jnp.float32)
    patches = jnp.pad(patches, ((0, 0), (0, 0), (0, Kp - K))).astype(jnp.bfloat16)

    kernel = functools.partial(_conv_block_kernel, slope=slope, use_in=use_in,
                               eps=eps, inv_p=1.0 / P)
    out = pl.pallas_call(
        kernel,
        out_shape=jax.ShapeDtypeStruct((N, P, Cp), jnp.float32),
        grid=(N,),
        in_specs=[
            pl.BlockSpec((1, P, Kp), lambda i: (i, 0, 0)),
            pl.BlockSpec((Kp, Cp), lambda i: (0, 0)),
            pl.BlockSpec((1, Cp), lambda i: (0, 0)),
        ],
        out_specs=pl.BlockSpec((1, P, Cp), lambda i: (i, 0, 0)),
        compiler_params=pltpu.CompilerParams(
            dimension_semantics=("parallel",),
            vmem_limit_bytes=32 * 1024 * 1024,
        ),
    )(patches, w2, b2)
    return out[:, :, :Cout].reshape(N, OH, OW, Cout)


# ---------------------------------------------------------------------------
# PatchDisNet forward (5 layers), parameters initialized deterministically
# (normal(0, 0.02) weights, zero bias — mirroring the usual GAN weights_init).
# ---------------------------------------------------------------------------
def init_params(key, channel, ngf):
    specs = [
        (ngf, channel),
        (ngf * 2, ngf),
        (ngf * 4, ngf * 2),
        (ngf * 8, ngf * 4),
        (1, ngf * 8),
    ]
    params = []
    for i, (co, ci) in enumerate(specs):
        kw_ = jax.random.fold_in(key, i)
        w = 0.02 * jax.random.normal(kw_, (co, ci, 4, 4), jnp.float32)
        b = jnp.zeros((co,), jnp.float32)
        params.append((w, b))
    return params


def patch_dis_net_forward(x_nchw, params):
    # kw=4, padw=ceil(3/2)=2 as in the PyTorch module.
    cfgs = [
        dict(stride=2, pad=2, slope=0.2, use_in=False),   # conv1: conv + LeakyReLU
        dict(stride=2, pad=2, slope=0.2, use_in=True),    # conv2: conv + LeakyReLU + IN
        dict(stride=2, pad=2, slope=0.2, use_in=True),    # conv3
        dict(stride=2, pad=2, slope=0.2, use_in=True),    # conv4
        dict(stride=1, pad=2, slope=None, use_in=False),  # conv5: conv only
    ]
    h = jnp.transpose(x_nchw, (0, 2, 3, 1))  # NCHW -> NHWC for the kernel path
    outs = []
    for (w, b), cfg in zip(params, cfgs):
        h = conv_layer(h, w, b, **cfg)
        outs.append(jnp.transpose(h, (0, 3, 1, 2)))  # return NCHW like PyTorch
    return outs  # [out1, out2, out3, out4, out5]


if __name__ == "__main__":
    key = jax.random.PRNGKey(0)
    channel, ngf = 4, 8
    x = jax.random.normal(jax.random.fold_in(key, 100), (2, channel, 16, 16), jnp.float32)
    params = init_params(key, channel, ngf)

    forward = jax.jit(patch_dis_net_forward)
    outs = forward(x, params)
    outs = jax.block_until_ready(outs)

    # sanity: expected PyTorch shapes for 16x16 input with k=4, p=2
    expected = [(2, ngf, 9, 9), (2, ngf * 2, 5, 5), (2, ngf * 4, 3, 3),
                (2, ngf * 8, 2, 2), (2, 1, 3, 3)]
    assert [tuple(o.shape) for o in outs] == expected, [o.shape for o in outs]
    assert all(bool(jnp.all(jnp.isfinite(o))) for o in outs)
    print("KERNEL_OK")
</pallas_src>

<mosaic_0001>
module attributes {stable_mosaic.version = 11 : i64} {
  func.func @_conv_block_kernel(%arg0: i32, %arg1: memref<1x81x128xbf16, #tpu.memory_space<vmem>>, %arg2: memref<128x128xbf16, #tpu.memory_space<vmem>>, %arg3: memref<1x128xf32, #tpu.memory_space<vmem>>, %arg4: memref<1x81x128xf32, #tpu.memory_space<vmem>>) attributes {dimension_semantics = [#tpu.dimension_semantics<parallel>], iteration_bounds = array<i64: 2>, scalar_prefetch = 0 : i64, scratch_operands = 0 : i64, tpu.core_type = #tpu.core_type<tc>, window_params = [{transform_indices = @transform_0, window_bounds = array<i64: 1, 81, 128>}, {pipeline_mode = #tpu.pipeline_mode<synchronous>, transform_indices = @transform_1, window_bounds = array<i64: 128, 128>}, {pipeline_mode = #tpu.pipeline_mode<synchronous>, transform_indices = @transform_2, window_bounds = array<i64: 1, 128>}, {transform_indices = @transform_3, window_bounds = array<i64: 1, 81, 128>}]} {
    %c0 = arith.constant 0 : index
    %c0_0 = arith.constant 0 : index
    %c0_1 = arith.constant 0 : index
    %0 = vector.load %arg1[%c0, %c0_0, %c0_1] : memref<1x81x128xbf16, #tpu.memory_space<vmem>>, vector<1x81x128xbf16>
    %1 = vector.shape_cast %0 : vector<1x81x128xbf16> to vector<81x128xbf16>
    %c0_2 = arith.constant 0 : index
    %c0_3 = arith.constant 0 : index
    %2 = vector.load %arg2[%c0_2, %c0_3] : memref<128x128xbf16, #tpu.memory_space<vmem>>, vector<128x128xbf16>
    %c0_4 = arith.constant 0 : index
    %c0_5 = arith.constant 0 : index
    %3 = vector.load %arg3[%c0_4, %c0_5] : memref<1x128xf32, #tpu.memory_space<vmem>>, vector<1x128xf32>
    %cst = arith.constant dense<0.000000e+00> : vector<81x128xf32>
    %4 = tpu.matmul %1, %2, %cst {dimension_numbers = #tpu.dot_dimension_numbers<[1], [0], [0], [1], [0, 0, 1, 1], [], []>} : vector<81x128xbf16>, vector<128x128xbf16>, vector<81x128xf32> -> vector<81x128xf32>
    %5 = vector.broadcast %3 : vector<1x128xf32> to vector<81x128xf32>
    %6 = arith.addf %4, %5 : vector<81x128xf32>
    %cst_6 = arith.constant 0.000000e+00 : f32
    %7 = vector.broadcast %cst_6 : f32 to vector<81x128xf32>
    %8 = arith.cmpf oge, %6, %7 : vector<81x128xf32>
    %cst_7 = arith.constant 2.000000e-01 : f32
    %9 = vector.broadcast %cst_7 : f32 to vector<81x128xf32>
    %10 = arith.mulf %9, %6 : vector<81x128xf32>
    %11 = arith.select %8, %6, %10 : vector<81x128xi1>, vector<81x128xf32>
    %c0_8 = arith.constant 0 : index
    %c0_9 = arith.constant 0 : index
    %c0_10 = arith.constant 0 : index
    %12 = vector.load %arg4[%c0_8, %c0_9, %c0_10] : memref<1x81x128xf32, #tpu.memory_space<vmem>>, vector<1x81x128xf32>
    %13 = vector.shape_cast %12 : vector<1x81x128xf32> to vector<81x128xf32>
    %14 = vector.shape_cast %11 : vector<81x128xf32> to vector<1x81x128xf32>
    tpu.vector_store %arg4[%c0_8, %c0_9, %c0_10], %14 {strides = array<i32>} : memref<1x81x128xf32, #tpu.memory_space<vmem>>, vector<1x81x128xf32>,
    return
  }
  func.func @transform_0(%arg0: i32) -> (i32, i32, i32) {
    %c0_i32 = arith.constant 0 : i32
    %c0_i32_0 = arith.constant 0 : i32
    %c0_i32_1 = arith.constant 0 : i32
    return %arg0, %c0_i32, %c0_i32_0 : i32, i32, i32
  }
  func.func @transform_1(%arg0: i32) -> (i32, i32) {
    %c0_i32 = arith.constant 0 : i32
    %c0_i32_0 = arith.constant 0 : i32
    %c0_i32_1 = arith.constant 0 : i32
    return %c0_i32, %c0_i32_0 : i32, i32
  }
  func.func @transform_2(%arg0: i32) -> (i32, i32) {
    %c0_i32 = arith.constant 0 : i32
    %c0_i32_0 = arith.constant 0 : i32
    %c0_i32_1 = arith.constant 0 : i32
    return %c0_i32, %c0_i32_0 : i32, i32
  }
  func.func @transform_3(%arg0: i32) -> (i32, i32, i32) {
    %c0_i32 = arith.constant 0 : i32
    %c0_i32_0 = arith.constant 0 : i32
    %c0_i32_1 = arith.constant 0 : i32
    return %arg0, %c0_i32, %c0_i32_0 : i32, i32, i32
  }
}

module attributes {stable_mosaic.version = 11 : i64} {
  func.func @_conv_block_kernel(%arg0: i32, %arg1: memref<1x25x128xbf16, #tpu.memory_space<vmem>>, %arg2: memref<128x128xbf16, #tpu.memory_space<vmem>>, %arg3: memref<1x128xf32, #tpu.memory_space<vmem>>, %arg4: memref<1x25x128xf32, #tpu.memory_space<vmem>>) attributes {dimension_semantics = [#tpu.dimension_semantics<parallel>], iteration_bounds = array<i64: 2>, scalar_prefetch = 0 : i64, scratch_operands = 0 : i64, tpu.core_type = #tpu.core_type<tc>, window_params = [{transform_indices = @transform_0, window_bounds = array<i64: 1, 25, 128>}, {pipeline_mode = #tpu.pipeline_mode<synchronous>, transform_indices = @transform_1, window_bounds = array<i64: 128, 128>}, {pipeline_mode = #tpu.pipeline_mode<synchronous>, transform_indices = @transform_2, window_bounds = array<i64: 1, 128>}, {transform_indices = @transform_3, window_bounds = array<i64: 1, 25, 128>}]} {
    %c0 = arith.constant 0 : index
    %c0_0 = arith.constant 0 : index
    %c0_1 = arith.constant 0 : index
    %0 = vector.load %arg1[%c0, %c0_0, %c0_1] : memref<1x25x128xbf16, #tpu.memory_space<vmem>>, vector<1x25x128xbf16>
    %1 = vector.shape_cast %0 : vector<1x25x128xbf16> to vector<25x128xbf16>
    %c0_2 = arith.constant 0 : index
    %c0_3 = arith.constant 0 : index
    %2 = vector.load %arg2[%c0_2, %c0_3] : memref<128x128xbf16, #tpu.memory_space<vmem>>, vector<128x128xbf16>
    %c0_4 = arith.constant 0 : index
    %c0_5 = arith.constant 0 : index
    %3 = vector.load %arg3[%c0_4, %c0_5] : memref<1x128xf32, #tpu.memory_space<vmem>>, vector<1x128xf32>
    %cst = arith.constant dense<0.000000e+00> : vector<25x128xf32>
    %4 = tpu.matmul %1, %2, %cst {dimension_numbers = #tpu.dot_dimension_numbers<[1], [0], [0], [1], [0, 0, 1, 1], [], []>} : vector<25x128xbf16>, vector<128x128xbf16>, vector<25x128xf32> -> vector<25x128xf32>
    %5 = vector.broadcast %3 : vector<1x128xf32> to vector<25x128xf32>
    %6 = arith.addf %4, %5 : vector<25x128xf32>
    %cst_6 = arith.constant 0.000000e+00 : f32
    %7 = vector.broadcast %cst_6 : f32 to vector<25x128xf32>
    %8 = arith.cmpf oge, %6, %7 : vector<25x128xf32>
    %cst_7 = arith.constant 2.000000e-01 : f32
    %9 = vector.broadcast %cst_7 : f32 to vector<25x128xf32>
    %10 = arith.mulf %9, %6 : vector<25x128xf32>
    %11 = arith.select %8, %6, %10 : vector<25x128xi1>, vector<25x128xf32>
    %cst_8 = arith.constant dense<0.000000e+00> : vector<128xf32>
    %12 = vector.multi_reduction <add>, %11, %cst_8 [0] : vector<25x128xf32> to vector<128xf32>
    %13 = vector.shape_cast %12 : vector<128xf32> to vector<1x128xf32>
    %14 = arith.mulf %11, %11 : vector<25x128xf32>
    %cst_9 = arith.constant dense<0.000000e+00> : vector<128xf32>
    %15 = vector.multi_reduction <add>, %14, %cst_9 [0] : vector<25x128xf32> to vector<128xf32>
    %16 = vector.shape_cast %15 : vector<128xf32> to vector<1x128xf32>
    %cst_10 = arith.constant 4.000000e-02 : f32
    %17 = vector.broadcast %cst_10 : f32 to vector<1x128xf32>
    %18 = arith.mulf %13, %17 : vector<1x128xf32>
    %cst_11 = arith.constant 4.000000e-02 : f32
    %19 = vector.broadcast %cst_11 : f32 to vector<1x128xf32>
    %20 = arith.mulf %16, %19 : vector<1x128xf32>
    %21 = arith.mulf %18, %18 : vector<1x128xf32>
    %22 = arith.subf %20, %21 : vector<1x128xf32>
    %cst_12 = arith.constant 0.000000e+00 : f32
    %23 = vector.broadcast %cst_12 : f32 to vector<1x128xf32>
    %24 = arith.maximumf %22, %23 : vector<1x128xf32>
    %25 = vector.broadcast %18 : vector<1x128xf32> to vector<25x128xf32>
    %26 = arith.subf %11, %25 : vector<25x128xf32>
    %cst_13 = arith.constant 9.99999974E-6 : f32
    %27 = vector.broadcast %cst_13 : f32 to vector<1x128xf32>
    %28 = arith.addf %24, %27 : vector<1x128xf32>
    %29 = math.rsqrt %28 : vector<1x128xf32>
    %30 = vector.broadcast %29 : vector<1x128xf32> to vector<25x128xf32>
    %31 = arith.mulf %26, %30 : vector<25x128xf32>
    %c0_14 = arith.constant 0 : index
    %c0_15 = arith.constant 0 : index
    %c0_16 = arith.constant 0 : index
    %32 = vector.load %arg4[%c0_14, %c0_15, %c0_16] : memref<1x25x128xf32, #tpu.memory_space<vmem>>, vector<1x25x128xf32>
    %33 = vector.shape_cast %32 : vector<1x25x128xf32> to vector<25x128xf32>
    %34 = vector.shape_cast %31 : vector<25x128xf32> to vector<1x25x128xf32>
    tpu.vector_store %arg4[%c0_14, %c0_15, %c0_16], %34 {strides = array<i32>} : memref<1x25x128xf32, #tpu.memory_space<vmem>>, vector<1x25x128xf32>,
    return
  }
  func.func @transform_0(%arg0: i32) -> (i32, i32, i32) {
    %c0_i32 = arith.constant 0 : i32
    %c0_i32_0 = arith.constant 0 : i32
    %c0_i32_1 = arith.constant 0 : i32
    return %arg0, %c0_i32, %c0_i32_0 : i32, i32, i32
  }
  func.func @transform_1(%arg0: i32) -> (i32, i32) {
    %c0_i32 = arith.constant 0 : i32
    %c0_i32_0 = arith.constant 0 : i32
    %c0_i32_1 = arith.constant 0 : i32
    return %c0_i32, %c0_i32_0 : i32, i32
  }
  func.func @transform_2(%arg0: i32) -> (i32, i32) {
    %c0_i32 = arith.constant 0 : i32
    %c0_i32_0 = arith.constant 0 : i32
    %c0_i32_1 = arith.constant 0 : i32
    return %c0_i32, %c0_i32_0 : i32, i32
  }
  func.func @transform_3(%arg0: i32) -> (i32, i32, i32) {
    %c0_i32 = arith.constant 0 : i32
    %c0_i32_0 = arith.constant 0 : i32
    %c0_i32_1 = arith.constant 0 : i32
    return %arg0, %c0_i32, %c0_i32_0 : i32, i32, i32
  }
}

module attributes {stable_mosaic.version = 11 : i64} {
  func.func @_conv_block_kernel(%arg0: i32, %arg1: memref<1x9x256xbf16, #tpu.memory_space<vmem>>, %arg2: memref<256x128xbf16, #tpu.memory_space<vmem>>, %arg3: memref<1x128xf32, #tpu.memory_space<vmem>>, %arg4: memref<1x9x128xf32, #tpu.memory_space<vmem>>) attributes {dimension_semantics = [#tpu.dimension_semantics<parallel>], iteration_bounds = array<i64: 2>, scalar_prefetch = 0 : i64, scratch_operands = 0 : i64, tpu.core_type = #tpu.core_type<tc>, window_params = [{transform_indices = @transform_0, window_bounds = array<i64: 1, 9, 256>}, {pipeline_mode = #tpu.pipeline_mode<synchronous>, transform_indices = @transform_1, window_bounds = array<i64: 256, 128>}, {pipeline_mode = #tpu.pipeline_mode<synchronous>, transform_indices = @transform_2, window_bounds = array<i64: 1, 128>}, {transform_indices = @transform_3, window_bounds = array<i64: 1, 9, 128>}]} {
    %c0 = arith.constant 0 : index
    %c0_0 = arith.constant 0 : index
    %c0_1 = arith.constant 0 : index
    %0 = vector.load %arg1[%c0, %c0_0, %c0_1] : memref<1x9x256xbf16, #tpu.memory_space<vmem>>, vector<1x9x256xbf16>
    %1 = vector.shape_cast %0 : vector<1x9x256xbf16> to vector<9x256xbf16>
    %c0_2 = arith.constant 0 : index
    %c0_3 = arith.constant 0 : index
    %2 = vector.load %arg2[%c0_2, %c0_3] : memref<256x128xbf16, #tpu.memory_space<vmem>>, vector<256x128xbf16>
    %c0_4 = arith.constant 0 : index
    %c0_5 = arith.constant 0 : index
    %3 = vector.load %arg3[%c0_4, %c0_5] : memref<1x128xf32, #tpu.memory_space<vmem>>, vector<1x128xf32>
    %cst = arith.constant dense<0.000000e+00> : vector<9x128xf32>
    %4 = tpu.matmul %1, %2, %cst {dimension_numbers = #tpu.dot_dimension_numbers<[1], [0], [0], [1], [0, 0, 1, 1], [], []>} : vector<9x256xbf16>, vector<256x128xbf16>, vector<9x128xf32> -> vector<9x128xf32>
    %5 = vector.broadcast %3 : vector<1x128xf32> to vector<9x128xf32>
    %6 = arith.addf %4, %5 : vector<9x128xf32>
    %cst_6 = arith.constant 0.000000e+00 : f32
    %7 = vector.broadcast %cst_6 : f32 to vector<9x128xf32>
    %8 = arith.cmpf oge, %6, %7 : vector<9x128xf32>
    %cst_7 = arith.constant 2.000000e-01 : f32
    %9 = vector.broadcast %cst_7 : f32 to vector<9x128xf32>
    %10 = arith.mulf %9, %6 : vector<9x128xf32>
    %11 = arith.select %8, %6, %10 : vector<9x128xi1>, vector<9x128xf32>
    %cst_8 = arith.constant dense<0.000000e+00> : vector<128xf32>
    %12 = vector.multi_reduction <add>, %11, %cst_8 [0] : vector<9x128xf32> to vector<128xf32>
    %13 = vector.shape_cast %12 : vector<128xf32> to vector<1x128xf32>
    %14 = arith.mulf %11, %11 : vector<9x128xf32>
    %cst_9 = arith.constant dense<0.000000e+00> : vector<128xf32>
    %15 = vector.multi_reduction <add>, %14, %cst_9 [0] : vector<9x128xf32> to vector<128xf32>
    %16 = vector.shape_cast %15 : vector<128xf32> to vector<1x128xf32>
    %cst_10 = arith.constant 0.111111112 : f32
    %17 = vector.broadcast %cst_10 : f32 to vector<1x128xf32>
    %18 = arith.mulf %13, %17 : vector<1x128xf32>
    %cst_11 = arith.constant 0.111111112 : f32
    %19 = vector.broadcast %cst_11 : f32 to vector<1x128xf32>
    %20 = arith.mulf %16, %19 : vector<1x128xf32>
    %21 = arith.mulf %18, %18 : vector<1x128xf32>
    %22 = arith.subf %20, %21 : vector<1x128xf32>
    %cst_12 = arith.constant 0.000000e+00 : f32
    %23 = vector.broadcast %cst_12 : f32 to vector<1x128xf32>
    %24 = arith.maximumf %22, %23 : vector<1x128xf32>
    %25 = vector.broadcast %18 : vector<1x128xf32> to vector<9x128xf32>
    %26 = arith.subf %11, %25 : vector<9x128xf32>
    %cst_13 = arith.constant 9.99999974E-6 : f32
    %27 = vector.broadcast %cst_13 : f32 to vector<1x128xf32>
    %28 = arith.addf %24, %27 : vector<1x128xf32>
    %29 = math.rsqrt %28 : vector<1x128xf32>
    %30 = vector.broadcast %29 : vector<1x128xf32> to vector<9x128xf32>
    %31 = arith.mulf %26, %30 : vector<9x128xf32>
    %c0_14 = arith.constant 0 : index
    %c0_15 = arith.constant 0 : index
    %c0_16 = arith.constant 0 : index
    %32 = vector.load %arg4[%c0_14, %c0_15, %c0_16] : memref<1x9x128xf32, #tpu.memory_space<vmem>>, vector<1x9x128xf32>
    %33 = vector.shape_cast %32 : vector<1x9x128xf32> to vector<9x128xf32>
    %34 = vector.shape_cast %31 : vector<9x128xf32> to vector<1x9x128xf32>
    tpu.vector_store %arg4[%c0_14, %c0_15, %c0_16], %34 {strides = array<i32>} : memref<1x9x128xf32, #tpu.memory_space<vmem>>, vector<1x9x128xf32>,
    return
  }
  func.func @transform_0(%arg0: i32) -> (i32, i32, i32) {
    %c0_i32 = arith.constant 0 : i32
    %c0_i32_0 = arith.constant 0 : i32
    %c0_i32_1 = arith.constant 0 : i32
    return %arg0, %c0_i32, %c0_i32_0 : i32, i32, i32
  }
  func.func @transform_1(%arg0: i32) -> (i32, i32) {
    %c0_i32 = arith.constant 0 : i32
    %c0_i32_0 = arith.constant 0 : i32
    %c0_i32_1 = arith.constant 0 : i32
    return %c0_i32, %c0_i32_0 : i32, i32
  }
  func.func @transform_2(%arg0: i32) -> (i32, i32) {
    %c0_i32 = arith.constant 0 : i32
    %c0_i32_0 = arith.constant 0 : i32
    %c0_i32_1 = arith.constant 0 : i32
    return %c0_i32, %c0_i32_0 : i32, i32
  }
  func.func @transform_3(%arg0: i32) -> (i32, i32, i32) {
    %c0_i32 = arith.constant 0 : i32
    %c0_i32_0 = arith.constant 0 : i32
    %c0_i32_1 = arith.constant 0 : i32
    return %arg0, %c0_i32, %c0_i32_0 : i32, i32, i32
  }
}

module attributes {stable_mosaic.version = 11 : i64} {
  func.func @_conv_block_kernel(%arg0: i32, %arg1: memref<1x4x512xbf16, #tpu.memory_space<vmem>>, %arg2: memref<512x128xbf16, #tpu.memory_space<vmem>>, %arg3: memref<1x128xf32, #tpu.memory_space<vmem>>, %arg4: memref<1x4x128xf32, #tpu.memory_space<vmem>>) attributes {dimension_semantics = [#tpu.dimension_semantics<parallel>], iteration_bounds = array<i64: 2>, scalar_prefetch = 0 : i64, scratch_operands = 0 : i64, tpu.core_type = #tpu.core_type<tc>, window_params = [{transform_indices = @transform_0, window_bounds = array<i64: 1, 4, 512>}, {pipeline_mode = #tpu.pipeline_mode<synchronous>, transform_indices = @transform_1, window_bounds = array<i64: 512, 128>}, {pipeline_mode = #tpu.pipeline_mode<synchronous>, transform_indices = @transform_2, window_bounds = array<i64: 1, 128>}, {transform_indices = @transform_3, window_bounds = array<i64: 1, 4, 128>}]} {
    %c0 = arith.constant 0 : index
    %c0_0 = arith.constant 0 : index
    %c0_1 = arith.constant 0 : index
    %0 = vector.load %arg1[%c0, %c0_0, %c0_1] : memref<1x4x512xbf16, #tpu.memory_space<vmem>>, vector<1x4x512xbf16>
    %1 = vector.shape_cast %0 : vector<1x4x512xbf16> to vector<4x512xbf16>
    %c0_2 = arith.constant 0 : index
    %c0_3 = arith.constant 0 : index
    %2 = vector.load %arg2[%c0_2, %c0_3] : memref<512x128xbf16, #tpu.memory_space<vmem>>, vector<512x128xbf16>
    %c0_4 = arith.constant 0 : index
    %c0_5 = arith.constant 0 : index
    %3 = vector.load %arg3[%c0_4, %c0_5] : memref<1x128xf32, #tpu.memory_space<vmem>>, vector<1x128xf32>
    %cst = arith.constant dense<0.000000e+00> : vector<4x128xf32>
    %4 = tpu.matmul %1, %2, %cst {dimension_numbers = #tpu.dot_dimension_numbers<[1], [0], [0], [1], [0, 0, 1, 1], [], []>} : vector<4x512xbf16>, vector<512x128xbf16>, vector<4x128xf32> -> vector<4x128xf32>
    %5 = vector.broadcast %3 : vector<1x128xf32> to vector<4x128xf32>
    %6 = arith.addf %4, %5 : vector<4x128xf32>
    %cst_6 = arith.constant 0.000000e+00 : f32
    %7 = vector.broadcast %cst_6 : f32 to vector<4x128xf32>
    %8 = arith.cmpf oge, %6, %7 : vector<4x128xf32>
    %cst_7 = arith.constant 2.000000e-01 : f32
    %9 = vector.broadcast %cst_7 : f32 to vector<4x128xf32>
    %10 = arith.mulf %9, %6 : vector<4x128xf32>
    %11 = arith.select %8, %6, %10 : vector<4x128xi1>, vector<4x128xf32>
    %cst_8 = arith.constant dense<0.000000e+00> : vector<128xf32>
    %12 = vector.multi_reduction <add>, %11, %cst_8 [0] : vector<4x128xf32> to vector<128xf32>
    %13 = vector.shape_cast %12 : vector<128xf32> to vector<1x128xf32>
    %14 = arith.mulf %11, %11 : vector<4x128xf32>
    %cst_9 = arith.constant dense<0.000000e+00> : vector<128xf32>
    %15 = vector.multi_reduction <add>, %14, %cst_9 [0] : vector<4x128xf32> to vector<128xf32>
    %16 = vector.shape_cast %15 : vector<128xf32> to vector<1x128xf32>
    %cst_10 = arith.constant 2.500000e-01 : f32
    %17 = vector.broadcast %cst_10 : f32 to vector<1x128xf32>
    %18 = arith.mulf %13, %17 : vector<1x128xf32>
    %cst_11 = arith.constant 2.500000e-01 : f32
    %19 = vector.broadcast %cst_11 : f32 to vector<1x128xf32>
    %20 = arith.mulf %16, %19 : vector<1x128xf32>
    %21 = arith.mulf %18, %18 : vector<1x128xf32>
    %22 = arith.subf %20, %21 : vector<1x128xf32>
    %cst_12 = arith.constant 0.000000e+00 : f32
    %23 = vector.broadcast %cst_12 : f32 to vector<1x128xf32>
    %24 = arith.maximumf %22, %23 : vector<1x128xf32>
    %25 = vector.broadcast %18 : vector<1x128xf32> to vector<4x128xf32>
    %26 = arith.subf %11, %25 : vector<4x128xf32>
    %cst_13 = arith.constant 9.99999974E-6 : f32
    %27 = vector.broadcast %cst_13 : f32 to vector<1x128xf32>
    %28 = arith.addf %24, %27 : vector<1x128xf32>
    %29 = math.rsqrt %28 : vector<1x128xf32>
    %30 = vector.broadcast %29 : vector<1x128xf32> to vector<4x128xf32>
    %31 = arith.mulf %26, %30 : vector<4x128xf32>
    %c0_14 = arith.constant 0 : index
    %c0_15 = arith.constant 0 : index
    %c0_16 = arith.constant 0 : index
    %32 = vector.load %arg4[%c0_14, %c0_15, %c0_16] : memref<1x4x128xf32, #tpu.memory_space<vmem>>, vector<1x4x128xf32>
    %33 = vector.shape_cast %32 : vector<1x4x128xf32> to vector<4x128xf32>
    %34 = vector.shape_cast %31 : vector<4x128xf32> to vector<1x4x128xf32>
    tpu.vector_store %arg4[%c0_14, %c0_15, %c0_16], %34 {strides = array<i32>} : memref<1x4x128xf32, #tpu.memory_space<vmem>>, vector<1x4x128xf32>,
    return
  }
  func.func @transform_0(%arg0: i32) -> (i32, i32, i32) {
    %c0_i32 = arith.constant 0 : i32
    %c0_i32_0 = arith.constant 0 : i32
    %c0_i32_1 = arith.constant 0 : i32
    return %arg0, %c0_i32, %c0_i32_0 : i32, i32, i32
  }
  func.func @transform_1(%arg0: i32) -> (i32, i32) {
    %c0_i32 = arith.constant 0 : i32
    %c0_i32_0 = arith.constant 0 : i32
    %c0_i32_1 = arith.constant 0 : i32
    return %c0_i32, %c0_i32_0 : i32, i32
  }
  func.func @transform_2(%arg0: i32) -> (i32, i32) {
    %c0_i32 = arith.constant 0 : i32
    %c0_i32_0 = arith.constant 0 : i32
    %c0_i32_1 = arith.constant 0 : i32
    return %c0_i32, %c0_i32_0 : i32, i32
  }
  func.func @transform_3(%arg0: i32) -> (i32, i32, i32) {
    %c0_i32 = arith.constant 0 : i32
    %c0_i32_0 = arith.constant 0 : i32
    %c0_i32_1 = arith.constant 0 : i32
    return %arg0, %c0_i32, %c0_i32_0 : i32, i32, i32
  }
}

module attributes {stable_mosaic.version = 11 : i64} {
  func.func @_conv_block_kernel(%arg0: i32, %arg1: memref<1x9x1024xbf16, #tpu.memory_space<vmem>>, %arg2: memref<1024x128xbf16, #tpu.memory_space<vmem>>, %arg3: memref<1x128xf32, #tpu.memory_space<vmem>>, %arg4: memref<1x9x128xf32, #tpu.memory_space<vmem>>) attributes {dimension_semantics = [#tpu.dimension_semantics<parallel>], iteration_bounds = array<i64: 2>, scalar_prefetch = 0 : i64, scratch_operands = 0 : i64, tpu.core_type = #tpu.core_type<tc>, window_params = [{transform_indices = @transform_0, window_bounds = array<i64: 1, 9, 1024>}, {pipeline_mode = #tpu.pipeline_mode<synchronous>, transform_indices = @transform_1, window_bounds = array<i64: 1024, 128>}, {pipeline_mode = #tpu.pipeline_mode<synchronous>, transform_indices = @transform_2, window_bounds = array<i64: 1, 128>}, {transform_indices = @transform_3, window_bounds = array<i64: 1, 9, 128>}]} {
    %c0 = arith.constant 0 : index
    %c0_0 = arith.constant 0 : index
    %c0_1 = arith.constant 0 : index
    %0 = vector.load %arg1[%c0, %c0_0, %c0_1] : memref<1x9x1024xbf16, #tpu.memory_space<vmem>>, vector<1x9x1024xbf16>
    %1 = vector.shape_cast %0 : vector<1x9x1024xbf16> to vector<9x1024xbf16>
    %c0_2 = arith.constant 0 : index
    %c0_3 = arith.constant 0 : index
    %2 = vector.load %arg2[%c0_2, %c0_3] : memref<1024x128xbf16, #tpu.memory_space<vmem>>, vector<1024x128xbf16>
    %c0_4 = arith.constant 0 : index
    %c0_5 = arith.constant 0 : index
    %3 = vector.load %arg3[%c0_4, %c0_5] : memref<1x128xf32, #tpu.memory_space<vmem>>, vector<1x128xf32>
    %cst = arith.constant dense<0.000000e+00> : vector<9x128xf32>
    %4 = tpu.matmul %1, %2, %cst {dimension_numbers = #tpu.dot_dimension_numbers<[1], [0], [0], [1], [0, 0, 1, 1], [], []>} : vector<9x1024xbf16>, vector<1024x128xbf16>, vector<9x128xf32> -> vector<9x128xf32>
    %5 = vector.broadcast %3 : vector<1x128xf32> to vector<9x128xf32>
    %6 = arith.addf %4, %5 : vector<9x128xf32>
    %c0_6 = arith.constant 0 : index
    %c0_7 = arith.constant 0 : index
    %c0_8 = arith.constant 0 : index
    %7 = vector.load %arg4[%c0_6, %c0_7, %c0_8] : memref<1x9x128xf32, #tpu.memory_space<vmem>>, vector<1x9x128xf32>
    %8 = vector.shape_cast %7 : vector<1x9x128xf32> to vector<9x128xf32>
    %9 = vector.shape_cast %6 : vector<9x128xf32> to vector<1x9x128xf32>
    tpu.vector_store %arg4[%c0_6, %c0_7, %c0_8], %9 {strides = array<i32>} : memref<1x9x128xf32, #tpu.memory_space<vmem>>, vector<1x9x128xf32>,
    return
  }
  func.func @transform_0(%arg0: i32) -> (i32, i32, i32) {
    %c0_i32 = arith.constant 0 : i32
    %c0_i32_0 = arith.constant 0 : i32
    %c0_i32_1 = arith.constant 0 : i32
    return %arg0, %c0_i32, %c0_i32_0 : i32, i32, i32
  }
  func.func @transform_1(%arg0: i32) -> (i32, i32) {
    %c0_i32 = arith.constant 0 : i32
    %c0_i32_0 = arith.constant 0 : i32
    %c0_i32_1 = arith.constant 0 : i32
    return %c0_i32, %c0_i32_0 : i32, i32
  }
  func.func @transform_2(%arg0: i32) -> (i32, i32) {
    %c0_i32 = arith.constant 0 : i32
    %c0_i32_0 = arith.constant 0 : i32
    %c0_i32_1 = arith.constant 0 : i32
    return %c0_i32, %c0_i32_0 : i32, i32
  }
  func.func @transform_3(%arg0: i32) -> (i32, i32, i32) {
    %c0_i32 = arith.constant 0 : i32
    %c0_i32_0 = arith.constant 0 : i32
    %c0_i32_1 = arith.constant 0 : i32
    return %arg0, %c0_i32, %c0_i32_0 : i32, i32, i32
  }
}

</mosaic_0001>

<llo_original>
// kernel: patch_dis_net_forward.5
$region0: #{patch_dis_net_forward.5}
  #allocation0 [shape = 'u32[]', space=smem, size = 0x4, offset = 0x4, fixed_abs, tag = 'smem constant byte address 0x4 - core index']
  #allocation1 [shape = 'u32[144,128]{1,0:T(1,128)}', space=vmem, size = 0x12000, scoped, tag = 'internal scratch']
  %s0 = inlined_call_operand.vmem [shape: bf16[2,81,128], index: 0, kind: input, shape index: {}]
  %s1 = inlined_call_operand.vmem [shape: bf16[128,128], index: 1, kind: input, shape index: {}]
  %s2 = inlined_call_operand.vmem [shape: f32[1,128], index: 2, kind: input, shape index: {}]
  %s3 = inlined_call_operand.vmem [shape: f32[2,81,128], index: 3, kind: output, shape index: {}]
  %s4 = sld [smem:[#allocation0]]
  $region45: #{patch_dis_net_forward.5} parent=0
    _
  %s6 = ssub.s32 1, %s4
  %s7 = scalar_select 0, %s6, %s4
  loop: start=0, step=1, limit=4
  $region2: #{patch_dis_net_forward.5} parent=0 // loop_pre_header
    _
  $region3: #{patch_dis_net_forward.5} parent=0 // loop_header
    %s9 = sphi 0, %s13
    %p10 = scmp.ge.s32.totalorder %s9, 4
    %s19 = sphi 0, %s21
    %s22 = sphi 0, %s19
    %s23 = sphi 0, %s22
    %s39 = sphi 0, %s23
    %s43 = sphi 0, %s43
    %s45 = sphi 0, %s43
    %s46 = sphi 0, %s45
    %s60 = sphi 0, %s46
    %s64 = sphi 0, %s64
    %s66 = sphi 0, %s64
    %s67 = sphi 0, %s66
    %s81 = sphi 0, %s67
    %s87 = sphi 0, %s89
    %s90 = sphi 0, %s87
    %s91 = sphi 0, %s90
    %s107 = sphi 0, %s91
  $region4: #{patch_dis_net_forward.5} parent=0 // loop_header_branch
    %12 = sbr.rel (%p10) target = $region8
  $region5: #{patch_dis_net_forward.5} parent=0 // loop_body
    %s14 = ssub.s32 %s9, 1
    %s15 = ssub.s32 %s9, 2
    %s16 = sadd.s32 %s9, 1
    %s17 = ssub.s32 %s9, %s16
    %p18 = scmp.eq.s32.totalorder %s17, 0
    %s20 = sadd.s32 %s19, 1
    %s21 = scalar_select %p18, %s19, %s20
    %p24 = pneg %p18
    %p25 = scmp.eq.s32.totalorder %s9, 1
    %p26 = por %p24, %p25
    %p27 = scmp.ne.s32.totalorder %s19, %s22
    %p28 = scmp.eq.s32.totalorder %s9, 0
    %p29 = por %p27, %p28
    %p30 = scmp.ne.s32.totalorder %s19, %s22
    %p31 = scmp.eq.s32.totalorder %s14, 1
    %p32 = por %p30, %p31
    %p33 = scmp.ne.s32.totalorder %s22, %s23
    %p34 = scmp.eq.s32.totalorder %s14, 0
    %p35 = por %p33, %p34
    %p36 = scmp.ne.s32.totalorder %s22, %s23
    %p37 = scmp.eq.s32.totalorder %s15, 1
    %p38 = por %p36, %p37
    %p40 = scmp.ne.s32.totalorder %s23, %s39
    %p41 = scmp.eq.s32.totalorder %s15, 0
    %p42 = por %p40, %p41
    %s44 = sadd.s32 %s43, 1
    %p47 = scmp.eq.s32.totalorder %s9, 1
    %p48 = scmp.ne.s32.totalorder %s43, %s45
    %p49 = scmp.eq.s32.totalorder %s9, 0
    %p50 = por %p48, %p49
    %p51 = scmp.ne.s32.totalorder %s43, %s45
    %p52 = scmp.eq.s32.totalorder %s14, 1
    %p53 = por %p51, %p52
    %p54 = scmp.ne.s32.totalorder %s45, %s46
    %p55 = scmp.eq.s32.totalorder %s14, 0
    %p56 = por %p54, %p55
    %p57 = scmp.ne.s32.totalorder %s45, %s46
    %p58 = scmp.eq.s32.totalorder %s15, 1
    %p59 = por %p57, %p58
    %p61 = scmp.ne.s32.totalorder %s46, %s60
    %p62 = scmp.eq.s32.totalorder %s15, 0
    %p63 = por %p61, %p62
    %s65 = sadd.s32 %s64, 1
    %p68 = scmp.eq.s32.totalorder %s9, 1
    %p69 = scmp.ne.s32.totalorder %s64, %s66
    %p70 = scmp.eq.s32.totalorder %s9, 0
    %p71 = por %p69, %p70
    %p72 = scmp.ne.s32.totalorder %s64, %s66
    %p73 = scmp.eq.s32.totalorder %s14, 1
    %p74 = por %p72, %p73
    %p75 = scmp.ne.s32.totalorder %s66, %s67
    %p76 = scmp.eq.s32.totalorder %s14, 0
    %p77 = por %p75, %p76
    %p78 = scmp.ne.s32.totalorder %s66, %s67
    %p79 = scmp.eq.s32.totalorder %s15, 1
    %p80 = por %p78, %p79
    %p82 = scmp.ne.s32.totalorder %s67, %s81
    %p83 = scmp.eq.s32.totalorder %s15, 0
    %p84 = por %p82, %p83
    %s85 = ssub.s32 %s9, %s16
    %p86 = scmp.eq.s32.totalorder %s85, 0
    %s88 = sadd.s32 %s87, 1
    %s89 = scalar_select %p86, %s87, %s88
    %p92 = pneg %p86
    %p93 = scmp.eq.s32.totalorder %s9, 1
    %p94 = por %p92, %p93
    %p95 = scmp.ne.s32.totalorder %s87, %s90
    %p96 = scmp.eq.s32.totalorder %s9, 0
    %p97 = por %p95, %p96
    %p98 = scmp.ne.s32.totalorder %s87, %s90
    %p99 = scmp.eq.s32.totalorder %s14, 1
    %p100 = por %p98, %p99
    %p101 = scmp.ne.s32.totalorder %s90, %s91
    %p102 = scmp.eq.s32.totalorder %s14, 0
    %p103 = por %p101, %p102
    %p104 = scmp.ne.s32.totalorder %s90, %s91
    %p105 = scmp.eq.s32.totalorder %s15, 1
    %p106 = por %p104, %p105
    %p108 = scmp.ne.s32.totalorder %s91, %s107
    %p109 = scmp.eq.s32.totalorder %s15, 0
    %p110 = por %p108, %p109
    %p111 = scmp.le.s32.totalorder 1, %s9
    %p112 = scmp.lt.s32.totalorder %s9, 3
    %p113 = pnand %p111, %p112
    %p114 = pneg %p113
    // Predicated region
    $region9: #{patch_dis_net_forward.5} parent=5 // pred_check
      _
    $region10: #{patch_dis_net_forward.5} parent=5 // pred_check_branch
      %116 = sbr.rel (%p113) target = $region12
    $region11: #{patch_dis_net_forward.5} parent=5 // pred_region
      %s117 = ssub.s32 %s9, 1
      // Predicated region
      $region13: #{patch_dis_net_forward.5} parent=11 // pred_check
        %p118 = pneg %p56
      $region14: #{patch_dis_net_forward.5} parent=11 // pred_check_branch
        %120 = sbr.rel (%p118) target = $region16
      $region15: #{patch_dis_net_forward.5} parent=11 // pred_region
        _
      $region16: #{patch_dis_net_forward.5} parent=11 // pred_fallthru
        _
      // Predicated region
      $region17: #{patch_dis_net_forward.5} parent=11 // pred_check
        %p121 = pneg %p77
      $region18: #{patch_dis_net_forward.5} parent=11 // pred_check_branch
        %123 = sbr.rel (%p121) target = $region20
      $region19: #{patch_dis_net_forward.5} parent=11 // pred_region
        _
      $region20: #{patch_dis_net_forward.5} parent=11 // pred_fallthru
        _
    $region12: #{patch_dis_net_forward.5} parent=5 // pred_fallthru
      _
    %p124 = scmp.lt.s32.totalorder %s9, 2
    // Predicated region
    $region21: #{patch_dis_net_forward.5} parent=5 // pred_check
      %p125 = pneg %p124
    $region22: #{patch_dis_net_forward.5} parent=5 // pred_check_branch
      %127 = sbr.rel (%p125) target = $region24
    $region23: #{patch_dis_net_forward.5} parent=5 // pred_region
      // Predicated region
      $region25: #{patch_dis_net_forward.5} parent=23 // pred_check
        %p128 = pneg %p29
      $region26: #{patch_dis_net_forward.5} parent=23 // pred_check_branch
        %130 = sbr.rel (%p128) target = $region28
      $region27: #{patch_dis_net_forward.5} parent=23 // pred_region
        %p131 = scmp.lt.s32.totalorder %s9, 1
        %s132 = scalar_select %p131, %s9, 1
        %s133 = smul.addr %s132, 11
        %s134 = smul.addr %s133, 4
        %s135 = scalar_lea.vmem %s0, %s134
      $region28: #{patch_dis_net_forward.5} parent=23 // pred_fallthru
        _
    $region24: #{patch_dis_net_forward.5} parent=5 // pred_fallthru
      _
    %p136 = scmp.le.s32.totalorder 1, %s9
    %p137 = scmp.lt.s32.totalorder %s9, 3
    %p138 = pnand %p136, %p137
    %p139 = pneg %p138
    // Predicated region
    $region29: #{patch_dis_net_forward.5} parent=5 // pred_check
      _
    $region30: #{patch_dis_net_forward.5} parent=5 // pred_check_branch
      %141 = sbr.rel (%p138) target = $region32
    $region31: #{patch_dis_net_forward.5} parent=5 // pred_region
      %s142 = ssub.s32 %s9, 1
      %p143 = scmp.lt.s32.totalorder %s14, 1
      %s144 = scalar_select %p143, %s14, 1
      %s145 = smul.addr %s144, 11
      %s146 = smul.addr %s145, 4
      %s147 = scalar_lea.vmem %s0, %s146
      %p148 = pneg %p35
      %p149 = pneg %p32
      %p150 = pneg %p56
      %p151 = pneg %p53
      %p152 = pneg %p77
      %p153 = pneg %p74
      %p154 = pneg %p103
      %p155 = pneg %p100
      %p156 = scmp.lt.s32.totalorder %s14, 1
      %s157 = scalar_select %p156, %s14, 1
      %s158 = smul.addr %s157, 11
      %s159 = smul.addr %s158, 8
      %s160 = scalar_lea.vmem %s3, %s159
      %p161 = scmp.lt.s32.totalorder %s14, 1
      %s162 = scalar_select %p161, %s14, 1
      %s163 = smul.addr %s162, 11
      %s164 = smul.addr %s163, 4
      %s165 = scalar_lea.vmem %s0, %s164
      %p166 = scmp.lt.s32.totalorder %s14, 1
      %s167 = scalar_select %p166, %s14, 1
      %s168 = smul.addr %s167, 11
      %s169 = smul.addr %s168, 8
      %s170 = scalar_lea.vmem %s3, %s169
      %v172 = vld [vmem:[%s165] sm:$0xf]
      %v173 = vld [vmem:[%s165 + $0x4] sm:$0xf]
      %v174 = vld [vmem:[%s165 + $0x8] sm:$0xf]
      %v175 = vld [vmem:[%s165 + $0xc] sm:$0xf]
      %v176 = vld [vmem:[%s165 + $0x10] sm:$0xf]
      %v177 = vld [vmem:[%s165 + $0x14] sm:$0xf]
      %v178 = vld [vmem:[%s165 + $0x18] sm:$0xf]
      %v179 = vld [vmem:[%s165 + $0x1c] sm:$0xf]
      %v180 = vld [vmem:[%s165 + $0x20] sm:$0xf]
      %v181 = vld [vmem:[%s165 + $0x24] sm:$0xf]
      %v182 = vld [vmem:[%s165 + $0x28] sm:$0x1]
      %v183 = vld [vmem:[%s1] sm:$0xf]
      %v184 = vld [vmem:[%s1 + $0x4] sm:$0xf]
      %v185 = vld [vmem:[%s1 + $0x8] sm:$0xf]
      %v186 = vld [vmem:[%s1 + $0xc] sm:$0xf]
      %v187 = vld [vmem:[%s1 + $0x10] sm:$0xf]
      %v188 = vld [vmem:[%s1 + $0x14] sm:$0xf]
      %v189 = vld [vmem:[%s1 + $0x18] sm:$0xf]
      %v190 = vld [vmem:[%s1 + $0x1c] sm:$0xf]
      %v191 = vld [vmem:[%s1 + $0x20] sm:$0xf]
      %v192 = vld [vmem:[%s1 + $0x24] sm:$0xf]
      %v193 = vld [vmem:[%s1 + $0x28] sm:$0xf]
      %v194 = vld [vmem:[%s1 + $0x2c] sm:$0xf]
      %v195 = vld [vmem:[%s1 + $0x30] sm:$0xf]
      %v196 = vld [vmem:[%s1 + $0x34] sm:$0xf]
      %v197 = vld [vmem:[%s1 + $0x38] sm:$0xf]
      %v198 = vld [vmem:[%s1 + $0x3c] sm:$0xf]
      %v199 = vld [vmem:[%s2] sm:$0x1]
      %v201 = vlaneseq
      %v202 = vshrl.u32 %v201, 7
      %v203 = vsub.s32 0, %v202
      %v204 = vrot.slane %v199, %v203
      %v217 = vunpack.c.l.b16 %v172
      %v218 = vunpack.c.l.b16 %v173
      %v219 = vunpack.c.l.b16 %v174
      %v220 = vunpack.c.l.b16 %v175
      %v221 = vunpack.c.l.b16 %v176
      %v222 = vunpack.c.l.b16 %v177
      %v223 = vunpack.c.l.b16 %v178
      %v224 = vunpack.c.l.b16 %v179
      %v225 = vunpack.c.l.b16 %v180
      %v226 = vunpack.c.l.b16 %v181
      %v227 = vunpack.c.l.b16 %v182
      %v228 = vpack.c.b16 %v218, %v217
      %v229 = vpack.c.b16 %v220, %v219
      %v230 = vpack.c.b16 %v222, %v221
      %v231 = vpack.c.b16 %v224, %v223
      %v232 = vpack.c.b16 %v226, %v225
      %v233 = vpack.c.b16 %v227, %v227
      %v256 = vunpack.c.l.b16 %v183
      %v257 = vunpack.c.l.b16 %v184
      %v258 = vunpack.c.l.b16 %v185
      %v259 = vunpack.c.l.b16 %v186
      %v260 = vunpack.c.l.b16 %v187
      %v261 = vunpack.c.l.b16 %v188
      %v262 = vunpack.c.l.b16 %v189
      %v263 = vunpack.c.l.b16 %v190
      %v264 = vunpack.c.l.b16 %v191
      %v265 = vunpack.c.l.b16 %v192
      %v266 = vunpack.c.l.b16 %v193
      %v267 = vunpack.c.l.b16 %v194
      %v268 = vunpack.c.l.b16 %v195
      %v269 = vunpack.c.l.b16 %v196
      %v270 = vunpack.c.l.b16 %v197
      %v271 = vunpack.c.l.b16 %v198
      %v272 = vpack.c.b16 %v257, %v256
      %v273 = vpack.c.b16 %v259, %v258
      %v274 = vpack.c.b16 %v261, %v260
      %v275 = vpack.c.b16 %v263, %v262
      %v276 = vpack.c.b16 %v265, %v264
      %v277 = vpack.c.b16 %v267, %v266
      %v278 = vpack.c.b16 %v269, %v268
      %v279 = vpack.c.b16 %v271, %v270
      %288 = vmatprep.subr.bf16.mxu0 0
      %289 = vmatpush1.bf16.msra.mxu0 %v279
      %290 = vmatprep.subr.bf16.mxu0 0
      %291 = vmatpush1.bf16.msra.mxu0 %v278
      %292 = vmatprep.subr.bf16.mxu0 0
      %293 = vmatpush1.bf16.msra.mxu0 %v277
      %294 = vmatprep.subr.bf16.mxu0 0
      %295 = vmatpush1.bf16.msra.mxu0 %v276
      %296 = vmatprep.subr.bf16.mxu0 0
      %297 = vmatpush1.bf16.msra.mxu0 %v275
      %298 = vmatprep.subr.bf16.mxu0 0
      %299 = vmatpush1.bf16.msra.mxu0 %v274
      %300 = vmatprep.subr.bf16.mxu0 0
      %301 = vmatpush1.bf16.msra.mxu0 %v273
      %302 = vmatprep.subr.bf16.mxu0 0
      %303 = vmatpush1.bf16.msra.mxu0 %v272
      %304 = vmatprep.subr.bf16.mxu0 0
      %305 = vmatpush2.bf16.msra.mxu0 0
      %306 = vmatprep.subr.bf16.mxu0 0
      %307 = vmatpush2.bf16.msra.mxu0 0
      %308 = vmatprep.subr.bf16.mxu0 0
      %309 = vmatpush2.bf16.msra.mxu0 0
      %310 = vmatprep.subr.bf16.mxu0 0
      %311 = vmatpush2.bf16.msra.mxu0 0
      %312 = vmatprep.subr.bf16.mxu0 0
      %313 = vmatpush2.bf16.msra.mxu0 0
      %314 = vmatprep.subr.bf16.mxu0 0
      %315 = vmatpush2.bf16.msra.mxu0 0
      %316 = vmatprep.subr.bf16.mxu0 0
      %317 = vmatpush2.bf16.msra.mxu0 0
      %318 = vmatprep.subr.bf16.mxu0 0
      %319 = vmatpush2.bf16.msra.mxu0 0
      %320 = vmatprep.mubr.bf16.mxu0 0
      %321 = vmatmul.mubr.bf16.gmra.mxu0 %v228
      %v322 = vpop.f32.mrf.mxu0
      %v323 = vadd.f32 %v204, %v322
      %v324 = vpop.f32.mrf.mxu0
      %v325 = vpop.f32.mrf.mxu0
      %v326 = vadd.f32 %v204, %v325
      %v327 = vpop.f32.mrf.mxu0
      %328 = vmatprep.mubr.bf16.mxu0 0
      %329 = vmatmul.mubr.bf16.gmra.mxu0 %v229
      %v330 = vpop.f32.mrf.mxu0
      %v331 = vadd.f32 %v204, %v330
      %v332 = vpop.f32.mrf.mxu0
      %v333 = vpop.f32.mrf.mxu0
      %v334 = vadd.f32 %v204, %v333
      %v335 = vpop.f32.mrf.mxu0
      %336 = vmatprep.mubr.bf16.mxu0 0
      %337 = vmatmul.mubr.bf16.gmra.mxu0 %v230
      %v338 = vpop.f32.mrf.mxu0
      %v339 = vadd.f32 %v204, %v338
      %v340 = vpop.f32.mrf.mxu0
      %v341 = vpop.f32.mrf.mxu0
      %v342 = vadd.f32 %v204, %v341
      %v343 = vpop.f32.mrf.mxu0
      %344 = vmatprep.mubr.bf16.mxu0 0
      %345 = vmatmul.mubr.bf16.gmra.mxu0 %v231
      %v346 = vpop.f32.mrf.mxu0
      %v347 = vadd.f32 %v204, %v346
      %v348 = vpop.f32.mrf.mxu0
      %v349 = vpop.f32.mrf.mxu0
      %v350 = vadd.f32 %v204, %v349
      %v351 = vpop.f32.mrf.mxu0
      %352 = vmatprep.mubr.bf16.mxu0 0
      %353 = vmatmul.mubr.bf16.gmra.mxu0 %v232
      %v354 = vpop.f32.mrf.mxu0
      %v355 = vadd.f32 %v204, %v354
      %v356 = vpop.f32.mrf.mxu0
      %v357 = vpop.f32.mrf.mxu0
      %v358 = vadd.f32 %v204, %v357
      %v359 = vpop.f32.mrf.mxu0
      %360 = vmatprep.mubr.bf16.mxu0 0
      %361 = vmatmul.mubr.bf16.gmra.mxu0 %v233
      %v362 = vpop.f32.mrf.mxu0
      %v363 = vadd.f32 %v204, %v362
      %v364 = vpop.f32.mrf.mxu0
      %v365 = vpop.f32.mrf.mxu0
      %v366 = vpop.f32.mrf.mxu0
      %367 = vdwg.mxu0
      %vm368 = vcmp.ge.f32.partialorder %v323, 0.0
      %vm369 = vcmp.ge.f32.partialorder %v326, 0.0
      %vm370 = vcmp.ge.f32.partialorder %v331, 0.0
      %vm371 = vcmp.ge.f32.partialorder %v334, 0.0
      %vm372 = vcmp.ge.f32.partialorder %v339, 0.0
      %vm373 = vcmp.ge.f32.partialorder %v342, 0.0
      %vm374 = vcmp.ge.f32.partialorder %v347, 0.0
      %vm375 = vcmp.ge.f32.partialorder %v350, 0.0
      %vm376 = vcmp.ge.f32.partialorder %v355, 0.0
      %vm377 = vcmp.ge.f32.partialorder %v358, 0.0
      %vm378 = vcmp.ge.f32.partialorder %v363, 0.0
      %v379 = vmul.f32 %v323, 0.2
      %v380 = vmul.f32 %v326, 0.2
      %v381 = vmul.f32 %v331, 0.2
      %v382 = vmul.f32 %v334, 0.2
      %v383 = vmul.f32 %v339, 0.2
      %v384 = vmul.f32 %v342, 0.2
      %v385 = vmul.f32 %v347, 0.2
      %v386 = vmul.f32 %v350, 0.2
      %v387 = vmul.f32 %v355, 0.2
      %v388 = vmul.f32 %v358, 0.2
      %v389 = vmul.f32 %v363, 0.2
      %v390 = vsel %vm368, %v323, %v379
      %v391 = vsel %vm369, %v326, %v380
      %v392 = vsel %vm370, %v331, %v381
      %v393 = vsel %vm371, %v334, %v382
      %v394 = vsel %vm372, %v339, %v383
      %v395 = vsel %vm373, %v342, %v384
      %v396 = vsel %vm374, %v347, %v385
      %v397 = vsel %vm375, %v350, %v386
      %v398 = vsel %vm376, %v355, %v387
      %v399 = vsel %vm377, %v358, %v388
      %v400 = vsel %vm378, %v363, %v389
      %401 = vst [vmem:[%s170] sm:$0xff] %v390
      %402 = vst [vmem:[%s170 + $0x8] sm:$0xff] %v391
      %403 = vst [vmem:[%s170 + $0x10] sm:$0xff] %v392
      %404 = vst [vmem:[%s170 + $0x18] sm:$0xff] %v393
      %405 = vst [vmem:[%s170 + $0x20] sm:$0xff] %v394
      %406 = vst [vmem:[%s170 + $0x28] sm:$0xff] %v395
      %407 = vst [vmem:[%s170 + $0x30] sm:$0xff] %v396
      %408 = vst [vmem:[%s170 + $0x38] sm:$0xff] %v397
      %409 = vst [vmem:[%s170 + $0x40] sm:$0xff] %v398
      %410 = vst [vmem:[%s170 + $0x48] sm:$0xff] %v399
      %411 = vst [vmem:[%s170 + $0x50] sm:$0x1] %v400
      %p412 = scmp.lt.s32.totalorder %s14, 1
      %s413 = scalar_select %p412, %s14, 1
      %s414 = smul.addr %s413, 11
      %s415 = smul.addr %s414, 8
      %s416 = scalar_lea.vmem %s3, %s415
      // Predicated region
      $region33: #{patch_dis_net_forward.5} parent=31 // pred_check
        %p417 = pneg %p100
      $region34: #{patch_dis_net_forward.5} parent=31 // pred_check_branch
        %419 = sbr.rel (%p417) target = $region36
      $region35: #{patch_dis_net_forward.5} parent=31 // pred_region
        _
      $region36: #{patch_dis_net_forward.5} parent=31 // pred_fallthru
        _
    $region32: #{patch_dis_net_forward.5} parent=5 // pred_fallthru
      _
    %p420 = scmp.le.s32.totalorder 2, %s9
    // Predicated region
    $region37: #{patch_dis_net_forward.5} parent=5 // pred_check
      %p421 = pneg %p420
    $region38: #{patch_dis_net_forward.5} parent=5 // pred_check_branch
      %423 = sbr.rel (%p421) target = $region40
    $region39: #{patch_dis_net_forward.5} parent=5 // pred_region
      %s424 = ssub.s32 %s9, 2
      // Predicated region
      $region41: #{patch_dis_net_forward.5} parent=39 // pred_check
        %p425 = pneg %p106
      $region42: #{patch_dis_net_forward.5} parent=39 // pred_check_branch
        %427 = sbr.rel (%p425) target = $region44
      $region43: #{patch_dis_net_forward.5} parent=39 // pred_region
        %p428 = scmp.lt.s32.totalorder %s15, 1
        %s429 = scalar_select %p428, %s15, 1
        %s430 = smul.addr %s429, 11
        %s431 = smul.addr %s430, 8
        %s432 = scalar_lea.vmem %s3, %s431
      $region44: #{patch_dis_net_forward.5} parent=39 // pred_fallthru
        _
    $region40: #{patch_dis_net_forward.5} parent=5 // pred_fallthru
      _
  $region6: #{patch_dis_net_forward.5} parent=0 // loop_footer
    %s13 = sadd.s32 1, %s9
  $region7: #{patch_dis_net_forward.5} parent=0 // loop_footer_branch
    %8 = sbr.rel target = $region3
  $region8: #{patch_dis_net_forward.5} parent=0 // loop_exit
    _

// kernel: patch_dis_net_forward.6
$region0: #{patch_dis_net_forward.6}
  #allocation0 [shape = 'u32[]', space=smem, size = 0x4, offset = 0x4, fixed_abs, tag = 'smem constant byte address 0x4 - core index']
  #allocation1 [shape = 'u32[144,128]{1,0:T(1,128)}', space=vmem, size = 0x12000, scoped, tag = 'internal scratch']
  %s0 = inlined_call_operand.vmem [shape: bf16[2,25,128], index: 0, kind: input, shape index: {}]
  %s1 = inlined_call_operand.vmem [shape: bf16[128,128], index: 1, kind: input, shape index: {}]
  %s2 = inlined_call_operand.vmem [shape: f32[1,128], index: 2, kind: input, shape index: {}]
  %s3 = inlined_call_operand.vmem [shape: f32[2,25,128], index: 3, kind: output, shape index: {}]
  %s4 = sld [smem:[#allocation0]]
  $region45: #{patch_dis_net_forward.6} parent=0
    _
  %s6 = ssub.s32 1, %s4
  %s7 = scalar_select 0, %s6, %s4
  loop: start=0, step=1, limit=4
  $region2: #{patch_dis_net_forward.6} parent=0 // loop_pre_header
    _
  $region3: #{patch_dis_net_forward.6} parent=0 // loop_header
    %s9 = sphi 0, %s13
    %p10 = scmp.ge.s32.totalorder %s9, 4
    %s19 = sphi 0, %s21
    %s22 = sphi 0, %s19
    %s23 = sphi 0, %s22
    %s39 = sphi 0, %s23
    %s43 = sphi 0, %s43
    %s45 = sphi 0, %s43
    %s46 = sphi 0, %s45
    %s60 = sphi 0, %s46
    %s64 = sphi 0, %s64
    %s66 = sphi 0, %s64
    %s67 = sphi 0, %s66
    %s81 = sphi 0, %s67
    %s87 = sphi 0, %s89
    %s90 = sphi 0, %s87
    %s91 = sphi 0, %s90
    %s107 = sphi 0, %s91
  $region4: #{patch_dis_net_forward.6} parent=0 // loop_header_branch
    %12 = sbr.rel (%p10) target = $region8
  $region5: #{patch_dis_net_forward.6} parent=0 // loop_body
    %s14 = ssub.s32 %s9, 1
    %s15 = ssub.s32 %s9, 2
    %s16 = sadd.s32 %s9, 1
    %s17 = ssub.s32 %s9, %s16
    %p18 = scmp.eq.s32.totalorder %s17, 0
    %s20 = sadd.s32 %s19, 1
    %s21 = scalar_select %p18, %s19, %s20
    %p24 = pneg %p18
    %p25 = scmp.eq.s32.totalorder %s9, 1
    %p26 = por %p24, %p25
    %p27 = scmp.ne.s32.totalorder %s19, %s22
    %p28 = scmp.eq.s32.totalorder %s9, 0
    %p29 = por %p27, %p28
    %p30 = scmp.ne.s32.totalorder %s19, %s22
    %p31 = scmp.eq.s32.totalorder %s14, 1
    %p32 = por %p30, %p31
    %p33 = scmp.ne.s32.totalorder %s22, %s23
    %p34 = scmp.eq.s32.totalorder %s14, 0
    %p35 = por %p33, %p34
    %p36 = scmp.ne.s32.totalorder %s22, %s23
    %p37 = scmp.eq.s32.totalorder %s15, 1
    %p38 = por %p36, %p37
    %p40 = scmp.ne.s32.totalorder %s23, %s39
    %p41 = scmp.eq.s32.totalorder %s15, 0
    %p42 = por %p40, %p41
    %s44 = sadd.s32 %s43, 1
    %p47 = scmp.eq.s32.totalorder %s9, 1
    %p48 = scmp.ne.s32.totalorder %s43, %s45
    %p49 = scmp.eq.s32.totalorder %s9, 0
    %p50 = por %p48, %p49
    %p51 = scmp.ne.s32.totalorder %s43, %s45
    %p52 = scmp.eq.s32.totalorder %s14, 1
    %p53 = por %p51, %p52
    %p54 = scmp.ne.s32.totalorder %s45, %s46
    %p55 = scmp.eq.s32.totalorder %s14, 0
    %p56 = por %p54, %p55
    %p57 = scmp.ne.s32.totalorder %s45, %s46
    %p58 = scmp.eq.s32.totalorder %s15, 1
    %p59 = por %p57, %p58
    %p61 = scmp.ne.s32.totalorder %s46, %s60
    %p62 = scmp.eq.s32.totalorder %s15, 0
    %p63 = por %p61, %p62
    %s65 = sadd.s32 %s64, 1
    %p68 = scmp.eq.s32.totalorder %s9, 1
    %p69 = scmp.ne.s32.totalorder %s64, %s66
    %p70 = scmp.eq.s32.totalorder %s9, 0
    %p71 = por %p69, %p70
    %p72 = scmp.ne.s32.totalorder %s64, %s66
    %p73 = scmp.eq.s32.totalorder %s14, 1
    %p74 = por %p72, %p73
    %p75 = scmp.ne.s32.totalorder %s66, %s67
    %p76 = scmp.eq.s32.totalorder %s14, 0
    %p77 = por %p75, %p76
    %p78 = scmp.ne.s32.totalorder %s66, %s67
    %p79 = scmp.eq.s32.totalorder %s15, 1
    %p80 = por %p78, %p79
    %p82 = scmp.ne.s32.totalorder %s67, %s81
    %p83 = scmp.eq.s32.totalorder %s15, 0
    %p84 = por %p82, %p83
    %s85 = ssub.s32 %s9, %s16
    %p86 = scmp.eq.s32.totalorder %s85, 0
    %s88 = sadd.s32 %s87, 1
    %s89 = scalar_select %p86, %s87, %s88
    %p92 = pneg %p86
    %p93 = scmp.eq.s32.totalorder %s9, 1
    %p94 = por %p92, %p93
    %p95 = scmp.ne.s32.totalorder %s87, %s90
    %p96 = scmp.eq.s32.totalorder %s9, 0
    %p97 = por %p95, %p96
    %p98 = scmp.ne.s32.totalorder %s87, %s90
    %p99 = scmp.eq.s32.totalorder %s14, 1
    %p100 = por %p98, %p99
    %p101 = scmp.ne.s32.totalorder %s90, %s91
    %p102 = scmp.eq.s32.totalorder %s14, 0
    %p103 = por %p101, %p102
    %p104 = scmp.ne.s32.totalorder %s90, %s91
    %p105 = scmp.eq.s32.totalorder %s15, 1
    %p106 = por %p104, %p105
    %p108 = scmp.ne.s32.totalorder %s91, %s107
    %p109 = scmp.eq.s32.totalorder %s15, 0
    %p110 = por %p108, %p109
    %p111 = scmp.le.s32.totalorder 1, %s9
    %p112 = scmp.lt.s32.totalorder %s9, 3
    %p113 = pnand %p111, %p112
    %p114 = pneg %p113
    // Predicated region
    $region9: #{patch_dis_net_forward.6} parent=5 // pred_check
      _
    $region10: #{patch_dis_net_forward.6} parent=5 // pred_check_branch
      %116 = sbr.rel (%p113) target = $region12
    $region11: #{patch_dis_net_forward.6} parent=5 // pred_region
      %s117 = ssub.s32 %s9, 1
      // Predicated region
      $region13: #{patch_dis_net_forward.6} parent=11 // pred_check
        %p118 = pneg %p56
      $region14: #{patch_dis_net_forward.6} parent=11 // pred_check_branch
        %120 = sbr.rel (%p118) target = $region16
      $region15: #{patch_dis_net_forward.6} parent=11 // pred_region
        _
      $region16: #{patch_dis_net_forward.6} parent=11 // pred_fallthru
        _
      // Predicated region
      $region17: #{patch_dis_net_forward.6} parent=11 // pred_check
        %p121 = pneg %p77
      $region18: #{patch_dis_net_forward.6} parent=11 // pred_check_branch
        %123 = sbr.rel (%p121) target = $region20
      $region19: #{patch_dis_net_forward.6} parent=11 // pred_region
        _
      $region20: #{patch_dis_net_forward.6} parent=11 // pred_fallthru
        _
    $region12: #{patch_dis_net_forward.6} parent=5 // pred_fallthru
      _
    %p124 = scmp.lt.s32.totalorder %s9, 2
    // Predicated region
    $region21: #{patch_dis_net_forward.6} parent=5 // pred_check
      %p125 = pneg %p124
    $region22: #{patch_dis_net_forward.6} parent=5 // pred_check_branch
      %127 = sbr.rel (%p125) target = $region24
    $region23: #{patch_dis_net_forward.6} parent=5 // pred_region
      // Predicated region
      $region25: #{patch_dis_net_forward.6} parent=23 // pred_check
        %p128 = pneg %p29
      $region26: #{patch_dis_net_forward.6} parent=23 // pred_check_branch
        %130 = sbr.rel (%p128) target = $region28
      $region27: #{patch_dis_net_forward.6} parent=23 // pred_region
        %p131 = scmp.lt.s32.totalorder %s9, 1
        %s132 = scalar_select %p131, %s9, 1
        %s133 = smul.addr %s132, 4
        %s134 = smul.addr %s133, 4
        %s135 = scalar_lea.vmem %s0, %s134
      $region28: #{patch_dis_net_forward.6} parent=23 // pred_fallthru
        _
    $region24: #{patch_dis_net_forward.6} parent=5 // pred_fallthru
      _
    %p136 = scmp.le.s32.totalorder 1, %s9
    %p137 = scmp.lt.s32.totalorder %s9, 3
    %p138 = pnand %p136, %p137
    %p139 = pneg %p138
    // Predicated region
    $region29: #{patch_dis_net_forward.6} parent=5 // pred_check
      _
    $region30: #{patch_dis_net_forward.6} parent=5 // pred_check_branch
      %141 = sbr.rel (%p138) target = $region32
    $region31: #{patch_dis_net_forward.6} parent=5 // pred_region
      %s142 = ssub.s32 %s9, 1
      %p143 = scmp.lt.s32.totalorder %s14, 1
      %s144 = scalar_select %p143, %s14, 1
      %s145 = smul.addr %s144, 4
      %s146 = smul.addr %s145, 4
      %s147 = scalar_lea.vmem %s0, %s146
      %p148 = pneg %p35
      %p149 = pneg %p32
      %p150 = pneg %p56
      %p151 = pneg %p53
      %p152 = pneg %p77
      %p153 = pneg %p74
      %p154 = pneg %p103
      %p155 = pneg %p100
      %p156 = scmp.lt.s32.totalorder %s14, 1
      %s157 = scalar_select %p156, %s14, 1
      %s158 = smul.addr %s157, 4
      %s159 = smul.addr %s158, 8
      %s160 = scalar_lea.vmem %s3, %s159
      %p161 = scmp.lt.s32.totalorder %s14, 1
      %s162 = scalar_select %p161, %s14, 1
      %s163 = smul.addr %s162, 4
      %s164 = smul.addr %s163, 4
      %s165 = scalar_lea.vmem %s0, %s164
      %p166 = scmp.lt.s32.totalorder %s14, 1
      %s167 = scalar_select %p166, %s14, 1
      %s168 = smul.addr %s167, 4
      %s169 = smul.addr %s168, 8
      %s170 = scalar_lea.vmem %s3, %s169
      %v172 = vld [vmem:[%s165] sm:$0xf]
      %v173 = vld [vmem:[%s165 + $0x4] sm:$0xf]
      %v174 = vld [vmem:[%s165 + $0x8] sm:$0xf]
      %v175 = vld [vmem:[%s165 + $0xc] sm:$0x1]
      %v176 = vld [vmem:[%s1] sm:$0xf]
      %v177 = vld [vmem:[%s1 + $0x4] sm:$0xf]
      %v178 = vld [vmem:[%s1 + $0x8] sm:$0xf]
      %v179 = vld [vmem:[%s1 + $0xc] sm:$0xf]
      %v180 = vld [vmem:[%s1 + $0x10] sm:$0xf]
      %v181 = vld [vmem:[%s1 + $0x14] sm:$0xf]
      %v182 = vld [vmem:[%s1 + $0x18] sm:$0xf]
      %v183 = vld [vmem:[%s1 + $0x1c] sm:$0xf]
      %v184 = vld [vmem:[%s1 + $0x20] sm:$0xf]
      %v185 = vld [vmem:[%s1 + $0x24] sm:$0xf]
      %v186 = vld [vmem:[%s1 + $0x28] sm:$0xf]
      %v187 = vld [vmem:[%s1 + $0x2c] sm:$0xf]
      %v188 = vld [vmem:[%s1 + $0x30] sm:$0xf]
      %v189 = vld [vmem:[%s1 + $0x34] sm:$0xf]
      %v190 = vld [vmem:[%s1 + $0x38] sm:$0xf]
      %v191 = vld [vmem:[%s1 + $0x3c] sm:$0xf]
      %v192 = vld [vmem:[%s2] sm:$0x1]
      %v194 = vlaneseq
      %v195 = vshrl.u32 %v194, 7
      %v196 = vsub.s32 0, %v195
      %v197 = vrot.slane %v192, %v196
      %v203 = vunpack.c.l.b16 %v172
      %v204 = vunpack.c.l.b16 %v173
      %v205 = vunpack.c.l.b16 %v174
      %v206 = vunpack.c.l.b16 %v175
      %v207 = vpack.c.b16 %v204, %v203
      %v208 = vpack.c.b16 %v206, %v205
      %v227 = vunpack.c.l.b16 %v176
      %v228 = vunpack.c.l.b16 %v177
      %v229 = vunpack.c.l.b16 %v178
      %v230 = vunpack.c.l.b16 %v179
      %v231 = vunpack.c.l.b16 %v180
      %v232 = vunpack.c.l.b16 %v181
      %v233 = vunpack.c.l.b16 %v182
      %v234 = vunpack.c.l.b16 %v183
      %v235 = vunpack.c.l.b16 %v184
      %v236 = vunpack.c.l.b16 %v185
      %v237 = vunpack.c.l.b16 %v186
      %v238 = vunpack.c.l.b16 %v187
      %v239 = vunpack.c.l.b16 %v188
      %v240 = vunpack.c.l.b16 %v189
      %v241 = vunpack.c.l.b16 %v190
      %v242 = vunpack.c.l.b16 %v191
      %v243 = vpack.c.b16 %v228, %v227
      %v244 = vpack.c.b16 %v230, %v229
      %v245 = vpack.c.b16 %v232, %v231
      %v246 = vpack.c.b16 %v234, %v233
      %v247 = vpack.c.b16 %v236, %v235
      %v248 = vpack.c.b16 %v238, %v237
      %v249 = vpack.c.b16 %v240, %v239
      %v250 = vpack.c.b16 %v242, %v241
      %259 = vmatprep.subr.bf16.mxu0 0
      %260 = vmatpush1.bf16.msra.mxu0 %v250
      %261 = vmatprep.subr.bf16.mxu0 0
      %262 = vmatpush1.bf16.msra.mxu0 %v249
      %263 = vmatprep.subr.bf16.mxu0 0
      %264 = vmatpush1.bf16.msra.mxu0 %v248
      %265 = vmatprep.subr.bf16.mxu0 0
      %266 = vmatpush1.bf16.msra.mxu0 %v247
      %267 = vmatprep.subr.bf16.mxu0 0
      %268 = vmatpush1.bf16.msra.mxu0 %v246
      %269 = vmatprep.subr.bf16.mxu0 0
      %270 = vmatpush1.bf16.msra.mxu0 %v245
      %271 = vmatprep.subr.bf16.mxu0 0
      %272 = vmatpush1.bf16.msra.mxu0 %v244
      %273 = vmatprep.subr.bf16.mxu0 0
      %274 = vmatpush1.bf16.msra.mxu0 %v243
      %275 = vmatprep.subr.bf16.mxu0 0
      %276 = vmatpush2.bf16.msra.mxu0 0
      %277 = vmatprep.subr.bf16.mxu0 0
      %278 = vmatpush2.bf16.msra.mxu0 0
      %279 = vmatprep.subr.bf16.mxu0 0
      %280 = vmatpush2.bf16.msra.mxu0 0
      %281 = vmatprep.subr.bf16.mxu0 0
      %282 = vmatpush2.bf16.msra.mxu0 0
      %283 = vmatprep.subr.bf16.mxu0 0
      %284 = vmatpush2.bf16.msra.mxu0 0
      %285 = vmatprep.subr.bf16.mxu0 0
      %286 = vmatpush2.bf16.msra.mxu0 0
      %287 = vmatprep.subr.bf16.mxu0 0
      %288 = vmatpush2.bf16.msra.mxu0 0
      %289 = vmatprep.subr.bf16.mxu0 0
      %290 = vmatpush2.bf16.msra.mxu0 0
      %291 = vmatprep.mubr.bf16.mxu0 0
      %292 = vmatmul.mubr.bf16.gmra.mxu0 %v207
      %v293 = vpop.f32.mrf.mxu0
      %v294 = vadd.f32 %v197, %v293
      %v295 = vpop.f32.mrf.mxu0
      %v296 = vpop.f32.mrf.mxu0
      %v297 = vadd.f32 %v197, %v296
      %v298 = vpop.f32.mrf.mxu0
      %299 = vmatprep.mubr.bf16.mxu0 0
      %300 = vmatmul.mubr.bf16.gmra.mxu0 %v208
      %v301 = vpop.f32.mrf.mxu0
      %v302 = vadd.f32 %v197, %v301
      %v303 = vpop.f32.mrf.mxu0
      %v304 = vpop.f32.mrf.mxu0
      %v305 = vadd.f32 %v197, %v304
      %v306 = vpop.f32.mrf.mxu0
      %307 = vdwg.mxu0
      %vm308 = vcmp.ge.f32.partialorder %v294, 0.0
      %vm309 = vcmp.ge.f32.partialorder %v297, 0.0
      %vm310 = vcmp.ge.f32.partialorder %v302, 0.0
      %vm311 = vcmp.ge.f32.partialorder %v305, 0.0
      %v312 = vmul.f32 %v294, 0.2
      %v313 = vmul.f32 %v297, 0.2
      %v314 = vmul.f32 %v302, 0.2
      %v315 = vmul.f32 %v305, 0.2
      %v316 = vsel %vm308, %v294, %v312
      %v317 = vsel %vm309, %v297, %v313
      %v318 = vsel %vm310, %v302, %v314
      %v319 = vsel %vm311, %v305, %v315
      %v320 = vadd.f32 %v316, %v317
      %v321 = vadd.f32 %v320, %v318
      %vm322 = vcmask 1040384
      %v323 = vsel %vm322, %v319, 0.0
      %v324 = vadd.f32 %v321, %v323
      %v325 = vrot.slane %v324, 4
      %v326 = vadd.f32 %v324, %v325
      %v327 = vrot.slane %v326, 2
      %v328 = vadd.f32 %v326, %v327
      %v329 = vrot.slane %v328, 1
      %v330 = vadd.f32 %v328, %v329
      %v331 = vmul.f32 %v316, %v316
      %v332 = vmul.f32 %v317, %v317
      %v333 = vmul.f32 %v318, %v318
      %v334 = vmul.f32 %v319, %v319
      %v335 = vadd.f32 %v331, %v332
      %v336 = vadd.f32 %v335, %v333
      %v337 = vsel %vm322, %v334, 0.0
      %v338 = vadd.f32 %v336, %v337
      %v339 = vrot.slane %v338, 4
      %v340 = vadd.f32 %v338, %v339
      %v341 = vrot.slane %v340, 2
      %v342 = vadd.f32 %v340, %v341
      %v343 = vrot.slane %v342, 1
      %v344 = vadd.f32 %v342, %v343
      %v345 = vmul.f32 %v330, 0.04
      %v346 = vmul.f32 %v344, 0.04
      %v347 = vmul.f32 %v345, %v345
      %v348 = vsub.f32 %v346, %v347
      %v349 = vmax.f32 %v348, 0.0
      %v350 = vsub.f32 %v316, %v345
      %v351 = vsub.f32 %v317, %v345
      %v352 = vsub.f32 %v318, %v345
      %v353 = vsub.f32 %v319, %v345
      %v354 = vadd.f32 %v349, 1e-05
      %v355 = vrsqrt.pop %v354
      %v356 = vmul.f32 %v350, %v355
      %v357 = vmul.f32 %v351, %v355
      %v358 = vmul.f32 %v352, %v355
      %v359 = vmul.f32 %v353, %v355
      %360 = vst [vmem:[%s170] sm:$0xff] %v356
      %361 = vst [vmem:[%s170 + $0x8] sm:$0xff] %v357
      %362 = vst [vmem:[%s170 + $0x10] sm:$0xff] %v358
      %363 = vst [vmem:[%s170 + $0x18] sm:$0x1] %v359
      %p364 = scmp.lt.s32.totalorder %s14, 1
      %s365 = scalar_select %p364, %s14, 1
      %s366 = smul.addr %s365, 4
      %s367 = smul.addr %s366, 8
      %s368 = scalar_lea.vmem %s3, %s367
      // Predicated region
      $region33: #{patch_dis_net_forward.6} parent=31 // pred_check
        %p369 = pneg %p100
      $region34: #{patch_dis_net_forward.6} parent=31 // pred_check_branch
        %371 = sbr.rel (%p369) target = $region36
      $region35: #{patch_dis_net_forward.6} parent=31 // pred_region
        _
      $region36: #{patch_dis_net_forward.6} parent=31 // pred_fallthru
        _
    $region32: #{patch_dis_net_forward.6} parent=5 // pred_fallthru
      _
    %p372 = scmp.le.s32.totalorder 2, %s9
    // Predicated region
    $region37: #{patch_dis_net_forward.6} parent=5 // pred_check
      %p373 = pneg %p372
    $region38: #{patch_dis_net_forward.6} parent=5 // pred_check_branch
      %375 = sbr.rel (%p373) target = $region40
    $region39: #{patch_dis_net_forward.6} parent=5 // pred_region
      %s376 = ssub.s32 %s9, 2
      // Predicated region
      $region41: #{patch_dis_net_forward.6} parent=39 // pred_check
        %p377 = pneg %p106
      $region42: #{patch_dis_net_forward.6} parent=39 // pred_check_branch
        %379 = sbr.rel (%p377) target = $region44
      $region43: #{patch_dis_net_forward.6} parent=39 // pred_region
        %p380 = scmp.lt.s32.totalorder %s15, 1
        %s381 = scalar_select %p380, %s15, 1
        %s382 = smul.addr %s381, 4
        %s383 = smul.addr %s382, 8
        %s384 = scalar_lea.vmem %s3, %s383
      $region44: #{patch_dis_net_forward.6} parent=39 // pred_fallthru
        _
    $region40: #{patch_dis_net_forward.6} parent=5 // pred_fallthru
      _
  $region6: #{patch_dis_net_forward.6} parent=0 // loop_footer
    %s13 = sadd.s32 1, %s9
  $region7: #{patch_dis_net_forward.6} parent=0 // loop_footer_branch
    %8 = sbr.rel target = $region3
  $region8: #{patch_dis_net_forward.6} parent=0 // loop_exit
    _

// kernel: patch_dis_net_forward.7
$region0: #{patch_dis_net_forward.7}
  #allocation0 [shape = 'u32[]', space=smem, size = 0x4, offset = 0x4, fixed_abs, tag = 'smem constant byte address 0x4 - core index']
  #allocation1 [shape = 'u32[144,128]{1,0:T(1,128)}', space=vmem, size = 0x12000, scoped, tag = 'internal scratch']
  %s0 = inlined_call_operand.vmem [shape: bf16[2,9,256], index: 0, kind: input, shape index: {}]
  %s1 = inlined_call_operand.vmem [shape: bf16[256,128], index: 1, kind: input, shape index: {}]
  %s2 = inlined_call_operand.vmem [shape: f32[1,128], index: 2, kind: input, shape index: {}]
  %s3 = inlined_call_operand.vmem [shape: f32[2,9,128], index: 3, kind: output, shape index: {}]
  %s4 = sld [smem:[#allocation0]]
  $region45: #{patch_dis_net_forward.7} parent=0
    _
  %s6 = ssub.s32 1, %s4
  %s7 = scalar_select 0, %s6, %s4
  loop: start=0, step=1, limit=4
  $region2: #{patch_dis_net_forward.7} parent=0 // loop_pre_header
    _
  $region3: #{patch_dis_net_forward.7} parent=0 // loop_header
    %s9 = sphi 0, %s13
    %p10 = scmp.ge.s32.totalorder %s9, 4
    %s19 = sphi 0, %s21
    %s22 = sphi 0, %s19
    %s23 = sphi 0, %s22
    %s39 = sphi 0, %s23
    %s43 = sphi 0, %s43
    %s45 = sphi 0, %s43
    %s46 = sphi 0, %s45
    %s60 = sphi 0, %s46
    %s64 = sphi 0, %s64
    %s66 = sphi 0, %s64
    %s67 = sphi 0, %s66
    %s81 = sphi 0, %s67
    %s87 = sphi 0, %s89
    %s90 = sphi 0, %s87
    %s91 = sphi 0, %s90
    %s107 = sphi 0, %s91
  $region4: #{patch_dis_net_forward.7} parent=0 // loop_header_branch
    %12 = sbr.rel (%p10) target = $region8
  $region5: #{patch_dis_net_forward.7} parent=0 // loop_body
    %s14 = ssub.s32 %s9, 1
    %s15 = ssub.s32 %s9, 2
    %s16 = sadd.s32 %s9, 1
    %s17 = ssub.s32 %s9, %s16
    %p18 = scmp.eq.s32.totalorder %s17, 0
    %s20 = sadd.s32 %s19, 1
    %s21 = scalar_select %p18, %s19, %s20
    %p24 = pneg %p18
    %p25 = scmp.eq.s32.totalorder %s9, 1
    %p26 = por %p24, %p25
    %p27 = scmp.ne.s32.totalorder %s19, %s22
    %p28 = scmp.eq.s32.totalorder %s9, 0
    %p29 = por %p27, %p28
    %p30 = scmp.ne.s32.totalorder %s19, %s22
    %p31 = scmp.eq.s32.totalorder %s14, 1
    %p32 = por %p30, %p31
    %p33 = scmp.ne.s32.totalorder %s22, %s23
    %p34 = scmp.eq.s32.totalorder %s14, 0
    %p35 = por %p33, %p34
    %p36 = scmp.ne.s32.totalorder %s22, %s23
    %p37 = scmp.eq.s32.totalorder %s15, 1
    %p38 = por %p36, %p37
    %p40 = scmp.ne.s32.totalorder %s23, %s39
    %p41 = scmp.eq.s32.totalorder %s15, 0
    %p42 = por %p40, %p41
    %s44 = sadd.s32 %s43, 1
    %p47 = scmp.eq.s32.totalorder %s9, 1
    %p48 = scmp.ne.s32.totalorder %s43, %s45
    %p49 = scmp.eq.s32.totalorder %s9, 0
    %p50 = por %p48, %p49
    %p51 = scmp.ne.s32.totalorder %s43, %s45
    %p52 = scmp.eq.s32.totalorder %s14, 1
    %p53 = por %p51, %p52
    %p54 = scmp.ne.s32.totalorder %s45, %s46
    %p55 = scmp.eq.s32.totalorder %s14, 0
    %p56 = por %p54, %p55
    %p57 = scmp.ne.s32.totalorder %s45, %s46
    %p58 = scmp.eq.s32.totalorder %s15, 1
    %p59 = por %p57, %p58
    %p61 = scmp.ne.s32.totalorder %s46, %s60
    %p62 = scmp.eq.s32.totalorder %s15, 0
    %p63 = por %p61, %p62
    %s65 = sadd.s32 %s64, 1
    %p68 = scmp.eq.s32.totalorder %s9, 1
    %p69 = scmp.ne.s32.totalorder %s64, %s66
    %p70 = scmp.eq.s32.totalorder %s9, 0
    %p71 = por %p69, %p70
    %p72 = scmp.ne.s32.totalorder %s64, %s66
    %p73 = scmp.eq.s32.totalorder %s14, 1
    %p74 = por %p72, %p73
    %p75 = scmp.ne.s32.totalorder %s66, %s67
    %p76 = scmp.eq.s32.totalorder %s14, 0
    %p77 = por %p75, %p76
    %p78 = scmp.ne.s32.totalorder %s66, %s67
    %p79 = scmp.eq.s32.totalorder %s15, 1
    %p80 = por %p78, %p79
    %p82 = scmp.ne.s32.totalorder %s67, %s81
    %p83 = scmp.eq.s32.totalorder %s15, 0
    %p84 = por %p82, %p83
    %s85 = ssub.s32 %s9, %s16
    %p86 = scmp.eq.s32.totalorder %s85, 0
    %s88 = sadd.s32 %s87, 1
    %s89 = scalar_select %p86, %s87, %s88
    %p92 = pneg %p86
    %p93 = scmp.eq.s32.totalorder %s9, 1
    %p94 = por %p92, %p93
    %p95 = scmp.ne.s32.totalorder %s87, %s90
    %p96 = scmp.eq.s32.totalorder %s9, 0
    %p97 = por %p95, %p96
    %p98 = scmp.ne.s32.totalorder %s87, %s90
    %p99 = scmp.eq.s32.totalorder %s14, 1
    %p100 = por %p98, %p99
    %p101 = scmp.ne.s32.totalorder %s90, %s91
    %p102 = scmp.eq.s32.totalorder %s14, 0
    %p103 = por %p101, %p102
    %p104 = scmp.ne.s32.totalorder %s90, %s91
    %p105 = scmp.eq.s32.totalorder %s15, 1
    %p106 = por %p104, %p105
    %p108 = scmp.ne.s32.totalorder %s91, %s107
    %p109 = scmp.eq.s32.totalorder %s15, 0
    %p110 = por %p108, %p109
    %p111 = scmp.le.s32.totalorder 1, %s9
    %p112 = scmp.lt.s32.totalorder %s9, 3
    %p113 = pnand %p111, %p112
    %p114 = pneg %p113
    // Predicated region
    $region9: #{patch_dis_net_forward.7} parent=5 // pred_check
      _
    $region10: #{patch_dis_net_forward.7} parent=5 // pred_check_branch
      %116 = sbr.rel (%p113) target = $region12
    $region11: #{patch_dis_net_forward.7} parent=5 // pred_region
      %s117 = ssub.s32 %s9, 1
      // Predicated region
      $region13: #{patch_dis_net_forward.7} parent=11 // pred_check
        %p118 = pneg %p56
      $region14: #{patch_dis_net_forward.7} parent=11 // pred_check_branch
        %120 = sbr.rel (%p118) target = $region16
      $region15: #{patch_dis_net_forward.7} parent=11 // pred_region
        _
      $region16: #{patch_dis_net_forward.7} parent=11 // pred_fallthru
        _
      // Predicated region
      $region17: #{patch_dis_net_forward.7} parent=11 // pred_check
        %p121 = pneg %p77
      $region18: #{patch_dis_net_forward.7} parent=11 // pred_check_branch
        %123 = sbr.rel (%p121) target = $region20
      $region19: #{patch_dis_net_forward.7} parent=11 // pred_region
        _
      $region20: #{patch_dis_net_forward.7} parent=11 // pred_fallthru
        _
    $region12: #{patch_dis_net_forward.7} parent=5 // pred_fallthru
      _
    %p124 = scmp.lt.s32.totalorder %s9, 2
    // Predicated region
    $region21: #{patch_dis_net_forward.7} parent=5 // pred_check
      %p125 = pneg %p124
    $region22: #{patch_dis_net_forward.7} parent=5 // pred_check_branch
      %127 = sbr.rel (%p125) target = $region24
    $region23: #{patch_dis_net_forward.7} parent=5 // pred_region
      // Predicated region
      $region25: #{patch_dis_net_forward.7} parent=23 // pred_check
        %p128 = pneg %p29
      $region26: #{patch_dis_net_forward.7} parent=23 // pred_check_branch
        %130 = sbr.rel (%p128) target = $region28
      $region27: #{patch_dis_net_forward.7} parent=23 // pred_region
        %p131 = scmp.lt.s32.totalorder %s9, 1
        %s132 = scalar_select %p131, %s9, 1
        %s133 = smul.addr %s132, 4
        %s134 = smul.addr %s133, 4
        %s135 = scalar_lea.vmem %s0, %s134
      $region28: #{patch_dis_net_forward.7} parent=23 // pred_fallthru
        _
    $region24: #{patch_dis_net_forward.7} parent=5 // pred_fallthru
      _
    %p136 = scmp.le.s32.totalorder 1, %s9
    %p137 = scmp.lt.s32.totalorder %s9, 3
    %p138 = pnand %p136, %p137
    %p139 = pneg %p138
    // Predicated region
    $region29: #{patch_dis_net_forward.7} parent=5 // pred_check
      _
    $region30: #{patch_dis_net_forward.7} parent=5 // pred_check_branch
      %141 = sbr.rel (%p138) target = $region32
    $region31: #{patch_dis_net_forward.7} parent=5 // pred_region
      %s142 = ssub.s32 %s9, 1
      %p143 = scmp.lt.s32.totalorder %s14, 1
      %s144 = scalar_select %p143, %s14, 1
      %s145 = smul.addr %s144, 4
      %s146 = smul.addr %s145, 4
      %s147 = scalar_lea.vmem %s0, %s146
      %p148 = pneg %p35
      %p149 = pneg %p32
      %p150 = pneg %p56
      %p151 = pneg %p53
      %p152 = pneg %p77
      %p153 = pneg %p74
      %p154 = pneg %p103
      %p155 = pneg %p100
      %p156 = scmp.lt.s32.totalorder %s14, 1
      %s157 = scalar_select %p156, %s14, 1
      %s158 = smul.addr %s157, 2
      %s159 = smul.addr %s158, 8
      %s160 = scalar_lea.vmem %s3, %s159
      %p161 = scmp.lt.s32.totalorder %s14, 1
      %s162 = scalar_select %p161, %s14, 1
      %s163 = smul.addr %s162, 4
      %s164 = smul.addr %s163, 4
      %s165 = scalar_lea.vmem %s0, %s164
      %p166 = scmp.lt.s32.totalorder %s14, 1
      %s167 = scalar_select %p166, %s14, 1
      %s168 = smul.addr %s167, 2
      %s169 = smul.addr %s168, 8
      %s170 = scalar_lea.vmem %s3, %s169
      %v172 = vld [vmem:[%s165] sm:$0xff]
      %v173 = vld [vmem:[%s165 + $0x8] sm:$0x11]
      %v174 = vld [vmem:[%s1] sm:$0xf]
      %v175 = vld [vmem:[%s1 + $0x4] sm:$0xf]
      %v176 = vld [vmem:[%s1 + $0x8] sm:$0xf]
      %v177 = vld [vmem:[%s1 + $0xc] sm:$0xf]
      %v178 = vld [vmem:[%s1 + $0x10] sm:$0xf]
      %v179 = vld [vmem:[%s1 + $0x14] sm:$0xf]
      %v180 = vld [vmem:[%s1 + $0x18] sm:$0xf]
      %v181 = vld [vmem:[%s1 + $0x1c] sm:$0xf]
      %v182 = vld [vmem:[%s1 + $0x20] sm:$0xf]
      %v183 = vld [vmem:[%s1 + $0x24] sm:$0xf]
      %v184 = vld [vmem:[%s1 + $0x28] sm:$0xf]
      %v185 = vld [vmem:[%s1 + $0x2c] sm:$0xf]
      %v186 = vld [vmem:[%s1 + $0x30] sm:$0xf]
      %v187 = vld [vmem:[%s1 + $0x34] sm:$0xf]
      %v188 = vld [vmem:[%s1 + $0x38] sm:$0xf]
      %v189 = vld [vmem:[%s1 + $0x3c] sm:$0xf]
      %v190 = vld [vmem:[%s1 + $0x40] sm:$0xf]
      %v191 = vld [vmem:[%s1 + $0x44] sm:$0xf]
      %v192 = vld [vmem:[%s1 + $0x48] sm:$0xf]
      %v193 = vld [vmem:[%s1 + $0x4c] sm:$0xf]
      %v194 = vld [vmem:[%s1 + $0x50] sm:$0xf]
      %v195 = vld [vmem:[%s1 + $0x54] sm:$0xf]
      %v196 = vld [vmem:[%s1 + $0x58] sm:$0xf]
      %v197 = vld [vmem:[%s1 + $0x5c] sm:$0xf]
      %v198 = vld [vmem:[%s1 + $0x60] sm:$0xf]
      %v199 = vld [vmem:[%s1 + $0x64] sm:$0xf]
      %v200 = vld [vmem:[%s1 + $0x68] sm:$0xf]
      %v201 = vld [vmem:[%s1 + $0x6c] sm:$0xf]
      %v202 = vld [vmem:[%s1 + $0x70] sm:$0xf]
      %v203 = vld [vmem:[%s1 + $0x74] sm:$0xf]
      %v204 = vld [vmem:[%s1 + $0x78] sm:$0xf]
      %v205 = vld [vmem:[%s1 + $0x7c] sm:$0xf]
      %v206 = vld [vmem:[%s2] sm:$0x1]
      %v208 = vlaneseq
      %v209 = vshrl.u32 %v208, 7
      %v210 = vsub.s32 0, %v209
      %v211 = vrot.slane %v206, %v210
      %v215 = vunpack.c.l.b16 %v172
      %v216 = vunpack.c.h.b16 %v172
      %v217 = vunpack.c.l.b16 %v173
      %v218 = vunpack.c.h.b16 %v173
      %v219 = vpack.c.b16 %v217, %v215
      %v220 = vpack.c.b16 %v218, %v216
      %v255 = vunpack.c.l.b16 %v174
      %v256 = vunpack.c.l.b16 %v175
      %v257 = vunpack.c.l.b16 %v176
      %v258 = vunpack.c.l.b16 %v177
      %v259 = vunpack.c.l.b16 %v178
      %v260 = vunpack.c.l.b16 %v179
      %v261 = vunpack.c.l.b16 %v180
      %v262 = vunpack.c.l.b16 %v181
      %v263 = vunpack.c.l.b16 %v182
      %v264 = vunpack.c.l.b16 %v183
      %v265 = vunpack.c.l.b16 %v184
      %v266 = vunpack.c.l.b16 %v185
      %v267 = vunpack.c.l.b16 %v186
      %v268 = vunpack.c.l.b16 %v187
      %v269 = vunpack.c.l.b16 %v188
      %v270 = vunpack.c.l.b16 %v189
      %v271 = vunpack.c.l.b16 %v190
      %v272 = vunpack.c.l.b16 %v191
      %v273 = vunpack.c.l.b16 %v192
      %v274 = vunpack.c.l.b16 %v193
      %v275 = vunpack.c.l.b16 %v194
      %v276 = vunpack.c.l.b16 %v195
      %v277 = vunpack.c.l.b16 %v196
      %v278 = vunpack.c.l.b16 %v197
      %v279 = vunpack.c.l.b16 %v198
      %v280 = vunpack.c.l.b16 %v199
      %v281 = vunpack.c.l.b16 %v200
      %v282 = vunpack.c.l.b16 %v201
      %v283 = vunpack.c.l.b16 %v202
      %v284 = vunpack.c.l.b16 %v203
      %v285 = vunpack.c.l.b16 %v204
      %v286 = vunpack.c.l.b16 %v205
      %v287 = vpack.c.b16 %v256, %v255
      %v288 = vpack.c.b16 %v258, %v257
      %v289 = vpack.c.b16 %v260, %v259
      %v290 = vpack.c.b16 %v262, %v261
      %v291 = vpack.c.b16 %v264, %v263
      %v292 = vpack.c.b16 %v266, %v265
      %v293 = vpack.c.b16 %v268, %v267
      %v294 = vpack.c.b16 %v270, %v269
      %v295 = vpack.c.b16 %v272, %v271
      %v296 = vpack.c.b16 %v274, %v273
      %v297 = vpack.c.b16 %v276, %v275
      %v298 = vpack.c.b16 %v278, %v277
      %v299 = vpack.c.b16 %v280, %v279
      %v300 = vpack.c.b16 %v282, %v281
      %v301 = vpack.c.b16 %v284, %v283
      %v302 = vpack.c.b16 %v286, %v285
      %319 = vmatprep.subr.bf16.mxu0 0
      %320 = vmatpush1.bf16.msra.mxu0 %v294
      %321 = vmatprep.subr.bf16.mxu0 0
      %322 = vmatpush1.bf16.msra.mxu0 %v293
      %323 = vmatprep.subr.bf16.mxu0 0
      %324 = vmatpush1.bf16.msra.mxu0 %v292
      %325 = vmatprep.subr.bf16.mxu0 0
      %326 = vmatpush1.bf16.msra.mxu0 %v291
      %327 = vmatprep.subr.bf16.mxu0 0
      %328 = vmatpush1.bf16.msra.mxu0 %v290
      %329 = vmatprep.subr.bf16.mxu0 0
      %330 = vmatpush1.bf16.msra.mxu0 %v289
      %331 = vmatprep.subr.bf16.mxu0 0
      %332 = vmatpush1.bf16.msra.mxu0 %v288
      %333 = vmatprep.subr.bf16.mxu0 0
      %334 = vmatpush1.bf16.msra.mxu0 %v287
      %335 = vmatprep.subr.bf16.mxu0 0
      %336 = vmatpush2.bf16.msra.mxu0 %v302
      %337 = vmatprep.subr.bf16.mxu0 0
      %338 = vmatpush2.bf16.msra.mxu0 %v301
      %339 = vmatprep.subr.bf16.mxu0 0
      %340 = vmatpush2.bf16.msra.mxu0 %v300
      %341 = vmatprep.subr.bf16.mxu0 0
      %342 = vmatpush2.bf16.msra.mxu0 %v299
      %343 = vmatprep.subr.bf16.mxu0 0
      %344 = vmatpush2.bf16.msra.mxu0 %v298
      %345 = vmatprep.subr.bf16.mxu0 0
      %346 = vmatpush2.bf16.msra.mxu0 %v297
      %347 = vmatprep.subr.bf16.mxu0 0
      %348 = vmatpush2.bf16.msra.mxu0 %v296
      %349 = vmatprep.subr.bf16.mxu0 0
      %350 = vmatpush2.bf16.msra.mxu0 %v295
      %351 = vmatprep.mubr.bf16.mxu0 %v220
      %352 = vmatmul.mubr.bf16.gmra.mxu0 %v219
      %v353 = vpop.f32.mrf.mxu0
      %v354 = vadd.f32 %v211, %v353
      %v355 = vpop.f32.mrf.mxu0
      %v356 = vpop.f32.mrf.mxu0
      %v357 = vadd.f32 %v211, %v356
      %v358 = vpop.f32.mrf.mxu0
      %359 = vdwg.mxu0
      %vm360 = vcmp.ge.f32.partialorder %v354, 0.0
      %vm361 = vcmp.ge.f32.partialorder %v357, 0.0
      %v362 = vmul.f32 %v354, 0.2
      %v363 = vmul.f32 %v357, 0.2
      %v364 = vsel %vm360, %v354, %v362
      %v365 = vsel %vm361, %v357, %v363
      %vm366 = vcmask 1040384
      %v367 = vsel %vm366, %v365, 0.0
      %v368 = vadd.f32 %v364, %v367
      %v369 = vrot.slane %v368, 4
      %v370 = vadd.f32 %v368, %v369
      %v371 = vrot.slane %v370, 2
      %v372 = vadd.f32 %v370, %v371
      %v373 = vrot.slane %v372, 1
      %v374 = vadd.f32 %v372, %v373
      %v375 = vmul.f32 %v364, %v364
      %v376 = vmul.f32 %v365, %v365
      %v377 = vsel %vm366, %v376, 0.0
      %v378 = vadd.f32 %v375, %v377
      %v379 = vrot.slane %v378, 4
      %v380 = vadd.f32 %v378, %v379
      %v381 = vrot.slane %v380, 2
      %v382 = vadd.f32 %v380, %v381
      %v383 = vrot.slane %v382, 1
      %v384 = vadd.f32 %v382, %v383
      %v385 = vmul.f32 %v374, 0.11111111
      %v386 = vmul.f32 %v384, 0.11111111
      %v387 = vmul.f32 %v385, %v385
      %v388 = vsub.f32 %v386, %v387
      %v389 = vmax.f32 %v388, 0.0
      %v390 = vsub.f32 %v364, %v385
      %v391 = vsub.f32 %v365, %v385
      %v392 = vadd.f32 %v389, 1e-05
      %v393 = vrsqrt.pop %v392
      %v394 = vmul.f32 %v390, %v393
      %v395 = vmul.f32 %v391, %v393
      %396 = vst [vmem:[%s170] sm:$0xff] %v394
      %397 = vst [vmem:[%s170 + $0x8] sm:$0x1] %v395
      %p398 = scmp.lt.s32.totalorder %s14, 1
      %s399 = scalar_select %p398, %s14, 1
      %s400 = smul.addr %s399, 2
      %s401 = smul.addr %s400, 8
      %s402 = scalar_lea.vmem %s3, %s401
      // Predicated region
      $region33: #{patch_dis_net_forward.7} parent=31 // pred_check
        %p403 = pneg %p100
      $region34: #{patch_dis_net_forward.7} parent=31 // pred_check_branch
        %405 = sbr.rel (%p403) target = $region36
      $region35: #{patch_dis_net_forward.7} parent=31 // pred_region
        _
      $region36: #{patch_dis_net_forward.7} parent=31 // pred_fallthru
        _
    $region32: #{patch_dis_net_forward.7} parent=5 // pred_fallthru
      _
    %p406 = scmp.le.s32.totalorder 2, %s9
    // Predicated region
    $region37: #{patch_dis_net_forward.7} parent=5 // pred_check
      %p407 = pneg %p406
    $region38: #{patch_dis_net_forward.7} parent=5 // pred_check_branch
      %409 = sbr.rel (%p407) target = $region40
    $region39: #{patch_dis_net_forward.7} parent=5 // pred_region
      %s410 = ssub.s32 %s9, 2
      // Predicated region
      $region41: #{patch_dis_net_forward.7} parent=39 // pred_check
        %p411 = pneg %p106
      $region42: #{patch_dis_net_forward.7} parent=39 // pred_check_branch
        %413 = sbr.rel (%p411) target = $region44
      $region43: #{patch_dis_net_forward.7} parent=39 // pred_region
        %p414 = scmp.lt.s32.totalorder %s15, 1
        %s415 = scalar_select %p414, %s15, 1
        %s416 = smul.addr %s415, 2
        %s417 = smul.addr %s416, 8
        %s418 = scalar_lea.vmem %s3, %s417
      $region44: #{patch_dis_net_forward.7} parent=39 // pred_fallthru
        _
    $region40: #{patch_dis_net_forward.7} parent=5 // pred_fallthru
      _
  $region6: #{patch_dis_net_forward.7} parent=0 // loop_footer
    %s13 = sadd.s32 1, %s9
  $region7: #{patch_dis_net_forward.7} parent=0 // loop_footer_branch
    %8 = sbr.rel target = $region3
  $region8: #{patch_dis_net_forward.7} parent=0 // loop_exit
    _

// kernel: patch_dis_net_forward.8
$region0: #{patch_dis_net_forward.8}
  #allocation0 [shape = 'u32[]', space=smem, size = 0x4, offset = 0x4, fixed_abs, tag = 'smem constant byte address 0x4 - core index']
  #allocation1 [shape = 'u32[144,128]{1,0:T(1,128)}', space=vmem, size = 0x12000, scoped, tag = 'internal scratch']
  %s0 = inlined_call_operand.vmem [shape: bf16[2,4,512], index: 0, kind: input, shape index: {}]
  %s1 = inlined_call_operand.vmem [shape: bf16[512,128], index: 1, kind: input, shape index: {}]
  %s2 = inlined_call_operand.vmem [shape: f32[1,128], index: 2, kind: input, shape index: {}]
  %s3 = inlined_call_operand.vmem [shape: f32[2,4,128], index: 3, kind: output, shape index: {}]
  %s4 = sld [smem:[#allocation0]]
  $region45: #{patch_dis_net_forward.8} parent=0
    _
  %s6 = ssub.s32 1, %s4
  %s7 = scalar_select 0, %s6, %s4
  loop: start=0, step=1, limit=4
  $region2: #{patch_dis_net_forward.8} parent=0 // loop_pre_header
    _
  $region3: #{patch_dis_net_forward.8} parent=0 // loop_header
    %s9 = sphi 0, %s13
    %p10 = scmp.ge.s32.totalorder %s9, 4
    %s19 = sphi 0, %s21
    %s22 = sphi 0, %s19
    %s23 = sphi 0, %s22
    %s39 = sphi 0, %s23
    %s43 = sphi 0, %s43
    %s45 = sphi 0, %s43
    %s46 = sphi 0, %s45
    %s60 = sphi 0, %s46
    %s64 = sphi 0, %s64
    %s66 = sphi 0, %s64
    %s67 = sphi 0, %s66
    %s81 = sphi 0, %s67
    %s87 = sphi 0, %s89
    %s90 = sphi 0, %s87
    %s91 = sphi 0, %s90
    %s107 = sphi 0, %s91
  $region4: #{patch_dis_net_forward.8} parent=0 // loop_header_branch
    %12 = sbr.rel (%p10) target = $region8
  $region5: #{patch_dis_net_forward.8} parent=0 // loop_body
    %s14 = ssub.s32 %s9, 1
    %s15 = ssub.s32 %s9, 2
    %s16 = sadd.s32 %s9, 1
    %s17 = ssub.s32 %s9, %s16
    %p18 = scmp.eq.s32.totalorder %s17, 0
    %s20 = sadd.s32 %s19, 1
    %s21 = scalar_select %p18, %s19, %s20
    %p24 = pneg %p18
    %p25 = scmp.eq.s32.totalorder %s9, 1
    %p26 = por %p24, %p25
    %p27 = scmp.ne.s32.totalorder %s19, %s22
    %p28 = scmp.eq.s32.totalorder %s9, 0
    %p29 = por %p27, %p28
    %p30 = scmp.ne.s32.totalorder %s19, %s22
    %p31 = scmp.eq.s32.totalorder %s14, 1
    %p32 = por %p30, %p31
    %p33 = scmp.ne.s32.totalorder %s22, %s23
    %p34 = scmp.eq.s32.totalorder %s14, 0
    %p35 = por %p33, %p34
    %p36 = scmp.ne.s32.totalorder %s22, %s23
    %p37 = scmp.eq.s32.totalorder %s15, 1
    %p38 = por %p36, %p37
    %p40 = scmp.ne.s32.totalorder %s23, %s39
    %p41 = scmp.eq.s32.totalorder %s15, 0
    %p42 = por %p40, %p41
    %s44 = sadd.s32 %s43, 1
    %p47 = scmp.eq.s32.totalorder %s9, 1
    %p48 = scmp.ne.s32.totalorder %s43, %s45
    %p49 = scmp.eq.s32.totalorder %s9, 0
    %p50 = por %p48, %p49
    %p51 = scmp.ne.s32.totalorder %s43, %s45
    %p52 = scmp.eq.s32.totalorder %s14, 1
    %p53 = por %p51, %p52
    %p54 = scmp.ne.s32.totalorder %s45, %s46
    %p55 = scmp.eq.s32.totalorder %s14, 0
    %p56 = por %p54, %p55
    %p57 = scmp.ne.s32.totalorder %s45, %s46
    %p58 = scmp.eq.s32.totalorder %s15, 1
    %p59 = por %p57, %p58
    %p61 = scmp.ne.s32.totalorder %s46, %s60
    %p62 = scmp.eq.s32.totalorder %s15, 0
    %p63 = por %p61, %p62
    %s65 = sadd.s32 %s64, 1
    %p68 = scmp.eq.s32.totalorder %s9, 1
    %p69 = scmp.ne.s32.totalorder %s64, %s66
    %p70 = scmp.eq.s32.totalorder %s9, 0
    %p71 = por %p69, %p70
    %p72 = scmp.ne.s32.totalorder %s64, %s66
    %p73 = scmp.eq.s32.totalorder %s14, 1
    %p74 = por %p72, %p73
    %p75 = scmp.ne.s32.totalorder %s66, %s67
    %p76 = scmp.eq.s32.totalorder %s14, 0
    %p77 = por %p75, %p76
    %p78 = scmp.ne.s32.totalorder %s66, %s67
    %p79 = scmp.eq.s32.totalorder %s15, 1
    %p80 = por %p78, %p79
    %p82 = scmp.ne.s32.totalorder %s67, %s81
    %p83 = scmp.eq.s32.totalorder %s15, 0
    %p84 = por %p82, %p83
    %s85 = ssub.s32 %s9, %s16
    %p86 = scmp.eq.s32.totalorder %s85, 0
    %s88 = sadd.s32 %s87, 1
    %s89 = scalar_select %p86, %s87, %s88
    %p92 = pneg %p86
    %p93 = scmp.eq.s32.totalorder %s9, 1
    %p94 = por %p92, %p93
    %p95 = scmp.ne.s32.totalorder %s87, %s90
    %p96 = scmp.eq.s32.totalorder %s9, 0
    %p97 = por %p95, %p96
    %p98 = scmp.ne.s32.totalorder %s87, %s90
    %p99 = scmp.eq.s32.totalorder %s14, 1
    %p100 = por %p98, %p99
    %p101 = scmp.ne.s32.totalorder %s90, %s91
    %p102 = scmp.eq.s32.totalorder %s14, 0
    %p103 = por %p101, %p102
    %p104 = scmp.ne.s32.totalorder %s90, %s91
    %p105 = scmp.eq.s32.totalorder %s15, 1
    %p106 = por %p104, %p105
    %p108 = scmp.ne.s32.totalorder %s91, %s107
    %p109 = scmp.eq.s32.totalorder %s15, 0
    %p110 = por %p108, %p109
    %p111 = scmp.le.s32.totalorder 1, %s9
    %p112 = scmp.lt.s32.totalorder %s9, 3
    %p113 = pnand %p111, %p112
    %p114 = pneg %p113
    // Predicated region
    $region9: #{patch_dis_net_forward.8} parent=5 // pred_check
      _
    $region10: #{patch_dis_net_forward.8} parent=5 // pred_check_branch
      %116 = sbr.rel (%p113) target = $region12
    $region11: #{patch_dis_net_forward.8} parent=5 // pred_region
      %s117 = ssub.s32 %s9, 1
      // Predicated region
      $region13: #{patch_dis_net_forward.8} parent=11 // pred_check
        %p118 = pneg %p56
      $region14: #{patch_dis_net_forward.8} parent=11 // pred_check_branch
        %120 = sbr.rel (%p118) target = $region16
      $region15: #{patch_dis_net_forward.8} parent=11 // pred_region
        _
      $region16: #{patch_dis_net_forward.8} parent=11 // pred_fallthru
        _
      // Predicated region
      $region17: #{patch_dis_net_forward.8} parent=11 // pred_check
        %p121 = pneg %p77
      $region18: #{patch_dis_net_forward.8} parent=11 // pred_check_branch
        %123 = sbr.rel (%p121) target = $region20
      $region19: #{patch_dis_net_forward.8} parent=11 // pred_region
        _
      $region20: #{patch_dis_net_forward.8} parent=11 // pred_fallthru
        _
    $region12: #{patch_dis_net_forward.8} parent=5 // pred_fallthru
      _
    %p124 = scmp.lt.s32.totalorder %s9, 2
    // Predicated region
    $region21: #{patch_dis_net_forward.8} parent=5 // pred_check
      %p125 = pneg %p124
    $region22: #{patch_dis_net_forward.8} parent=5 // pred_check_branch
      %127 = sbr.rel (%p125) target = $region24
    $region23: #{patch_dis_net_forward.8} parent=5 // pred_region
      // Predicated region
      $region25: #{patch_dis_net_forward.8} parent=23 // pred_check
        %p128 = pneg %p29
      $region26: #{patch_dis_net_forward.8} parent=23 // pred_check_branch
        %130 = sbr.rel (%p128) target = $region28
      $region27: #{patch_dis_net_forward.8} parent=23 // pred_region
        %p131 = scmp.lt.s32.totalorder %s9, 1
        %s132 = scalar_select %p131, %s9, 1
        %s133 = smul.addr %s132, 4
        %s134 = smul.addr %s133, 2
        %s135 = scalar_lea.vmem %s0, %s134
      $region28: #{patch_dis_net_forward.8} parent=23 // pred_fallthru
        _
    $region24: #{patch_dis_net_forward.8} parent=5 // pred_fallthru
      _
    %p136 = scmp.le.s32.totalorder 1, %s9
    %p137 = scmp.lt.s32.totalorder %s9, 3
    %p138 = pnand %p136, %p137
    %p139 = pneg %p138
    // Predicated region
    $region29: #{patch_dis_net_forward.8} parent=5 // pred_check
      _
    $region30: #{patch_dis_net_forward.8} parent=5 // pred_check_branch
      %141 = sbr.rel (%p138) target = $region32
    $region31: #{patch_dis_net_forward.8} parent=5 // pred_region
      %s142 = ssub.s32 %s9, 1
      %p143 = scmp.lt.s32.totalorder %s14, 1
      %s144 = scalar_select %p143, %s14, 1
      %s145 = smul.addr %s144, 4
      %s146 = smul.addr %s145, 2
      %s147 = scalar_lea.vmem %s0, %s146
      %p148 = pneg %p35
      %p149 = pneg %p32
      %p150 = pneg %p56
      %p151 = pneg %p53
      %p152 = pneg %p77
      %p153 = pneg %p74
      %p154 = pneg %p103
      %p155 = pneg %p100
      %p156 = scmp.lt.s32.totalorder %s14, 1
      %s157 = scalar_select %p156, %s14, 1
      %s158 = smul.addr %s157, 4
      %s159 = scalar_lea.vmem %s3, %s158
      %p160 = scmp.lt.s32.totalorder %s14, 1
      %s161 = scalar_select %p160, %s14, 1
      %s162 = smul.addr %s161, 4
      %s163 = smul.addr %s162, 2
      %s164 = scalar_lea.vmem %s0, %s163
      %p165 = scmp.lt.s32.totalorder %s14, 1
      %s166 = scalar_select %p165, %s14, 1
      %s167 = smul.addr %s166, 4
      %s168 = scalar_lea.vmem %s3, %s167
      %v170 = vld [vmem:[%s164] sm:$0xff]
      %v171 = vld [vmem:[%s1] sm:$0xf]
      %v172 = vld [vmem:[%s1 + $0x4] sm:$0xf]
      %v173 = vld [vmem:[%s1 + $0x8] sm:$0xf]
      %v174 = vld [vmem:[%s1 + $0xc] sm:$0xf]
      %v175 = vld [vmem:[%s1 + $0x10] sm:$0xf]
      %v176 = vld [vmem:[%s1 + $0x14] sm:$0xf]
      %v177 = vld [vmem:[%s1 + $0x18] sm:$0xf]
      %v178 = vld [vmem:[%s1 + $0x1c] sm:$0xf]
      %v179 = vld [vmem:[%s1 + $0x20] sm:$0xf]
      %v180 = vld [vmem:[%s1 + $0x24] sm:$0xf]
      %v181 = vld [vmem:[%s1 + $0x28] sm:$0xf]
      %v182 = vld [vmem:[%s1 + $0x2c] sm:$0xf]
      %v183 = vld [vmem:[%s1 + $0x30] sm:$0xf]
      %v184 = vld [vmem:[%s1 + $0x34] sm:$0xf]
      %v185 = vld [vmem:[%s1 + $0x38] sm:$0xf]
      %v186 = vld [vmem:[%s1 + $0x3c] sm:$0xf]
      %v187 = vld [vmem:[%s1 + $0x40] sm:$0xf]
      %v188 = vld [vmem:[%s1 + $0x44] sm:$0xf]
      %v189 = vld [vmem:[%s1 + $0x48] sm:$0xf]
      %v190 = vld [vmem:[%s1 + $0x4c] sm:$0xf]
      %v191 = vld [vmem:[%s1 + $0x50] sm:$0xf]
      %v192 = vld [vmem:[%s1 + $0x54] sm:$0xf]
      %v193 = vld [vmem:[%s1 + $0x58] sm:$0xf]
      %v194 = vld [vmem:[%s1 + $0x5c] sm:$0xf]
      %v195 = vld [vmem:[%s1 + $0x60] sm:$0xf]
      %v196 = vld [vmem:[%s1 + $0x64] sm:$0xf]
      %v197 = vld [vmem:[%s1 + $0x68] sm:$0xf]
      %v198 = vld [vmem:[%s1 + $0x6c] sm:$0xf]
      %v199 = vld [vmem:[%s1 + $0x70] sm:$0xf]
      %v200 = vld [vmem:[%s1 + $0x74] sm:$0xf]
      %v201 = vld [vmem:[%s1 + $0x78] sm:$0xf]
      %v202 = vld [vmem:[%s1 + $0x7c] sm:$0xf]
      %v203 = vld [vmem:[%s1 + $0x80] sm:$0xf]
      %v204 = vld [vmem:[%s1 + $0x84] sm:$0xf]
      %v205 = vld [vmem:[%s1 + $0x88] sm:$0xf]
      %v206 = vld [vmem:[%s1 + $0x8c] sm:$0xf]
      %v207 = vld [vmem:[%s1 + $0x90] sm:$0xf]
      %v208 = vld [vmem:[%s1 + $0x94] sm:$0xf]
      %v209 = vld [vmem:[%s1 + $0x98] sm:$0xf]
      %v210 = vld [vmem:[%s1 + $0x9c] sm:$0xf]
      %v211 = vld [vmem:[%s1 + $0xa0] sm:$0xf]
      %v212 = vld [vmem:[%s1 + $0xa4] sm:$0xf]
      %v213 = vld [vmem:[%s1 + $0xa8] sm:$0xf]
      %v214 = vld [vmem:[%s1 + $0xac] sm:$0xf]
      %v215 = vld [vmem:[%s1 + $0xb0] sm:$0xf]
      %v216 = vld [vmem:[%s1 + $0xb4] sm:$0xf]
      %v217 = vld [vmem:[%s1 + $0xb8] sm:$0xf]
      %v218 = vld [vmem:[%s1 + $0xbc] sm:$0xf]
      %v219 = vld [vmem:[%s1 + $0xc0] sm:$0xf]
      %v220 = vld [vmem:[%s1 + $0xc4] sm:$0xf]
      %v221 = vld [vmem:[%s1 + $0xc8] sm:$0xf]
      %v222 = vld [vmem:[%s1 + $0xcc] sm:$0xf]
      %v223 = vld [vmem:[%s1 + $0xd0] sm:$0xf]
      %v224 = vld [vmem:[%s1 + $0xd4] sm:$0xf]
      %v225 = vld [vmem:[%s1 + $0xd8] sm:$0xf]
      %v226 = vld [vmem:[%s1 + $0xdc] sm:$0xf]
      %v227 = vld [vmem:[%s1 + $0xe0] sm:$0xf]
      %v228 = vld [vmem:[%s1 + $0xe4] sm:$0xf]
      %v229 = vld [vmem:[%s1 + $0xe8] sm:$0xf]
      %v230 = vld [vmem:[%s1 + $0xec] sm:$0xf]
      %v231 = vld [vmem:[%s1 + $0xf0] sm:$0xf]
      %v232 = vld [vmem:[%s1 + $0xf4] sm:$0xf]
      %v233 = vld [vmem:[%s1 + $0xf8] sm:$0xf]
      %v234 = vld [vmem:[%s1 + $0xfc] sm:$0xf]
      %v235 = vld [vmem:[%s2] sm:$0x1]
      %v237 = vlaneseq
      %v238 = vshrl.u32 %v237, 7
      %v239 = vsub.s32 0, %v238
      %v240 = vrot.slane %v235, %v239
      %v243 = vcombine.high %v170, %v170
      %v245 = vunpack.c.l.s4 1983009808
      %v246 = vunpack.c.0.s8 %v245
      %v247 = vlaneseq
      %v248 = vshrl.u32 %v247, 7
      %v249 = vsub.s32 %v246, %v248
      %v250 = vrot.slane %v170, %v249
      %v252 = vunpack.c.l.s4 1983009808
      %v253 = vunpack.c.0.s8 %v252
      %v254 = vlaneseq
      %v255 = vshrl.u32 %v254, 7
      %v256 = vsub.s32 %v253, %v255
      %v257 = vrot.slane %v243, %v256
      %v258 = vcombine.high %v250, %v250
      %v259 = vcombine.high %v257, %v257
      %v328 = vunpack.c.l.b16 %v171
      %v329 = vunpack.c.l.b16 %v172
      %v330 = vunpack.c.l.b16 %v173
      %v331 = vunpack.c.l.b16 %v174
      %v332 = vunpack.c.l.b16 %v175
      %v333 = vunpack.c.l.b16 %v176
      %v334 = vunpack.c.l.b16 %v177
      %v335 = vunpack.c.l.b16 %v178
      %v336 = vunpack.c.l.b16 %v179
      %v337 = vunpack.c.l.b16 %v180
      %v338 = vunpack.c.l.b16 %v181
      %v339 = vunpack.c.l.b16 %v182
      %v340 = vunpack.c.l.b16 %v183
      %v341 = vunpack.c.l.b16 %v184
      %v342 = vunpack.c.l.b16 %v185
      %v343 = vunpack.c.l.b16 %v186
      %v344 = vunpack.c.l.b16 %v187
      %v345 = vunpack.c.l.b16 %v188
      %v346 = vunpack.c.l.b16 %v189
      %v347 = vunpack.c.l.b16 %v190
      %v348 = vunpack.c.l.b16 %v191
      %v349 = vunpack.c.l.b16 %v192
      %v350 = vunpack.c.l.b16 %v193
      %v351 = vunpack.c.l.b16 %v194
      %v352 = vunpack.c.l.b16 %v195
      %v353 = vunpack.c.l.b16 %v196
      %v354 = vunpack.c.l.b16 %v197
      %v355 = vunpack.c.l.b16 %v198
      %v356 = vunpack.c.l.b16 %v199
      %v357 = vunpack.c.l.b16 %v200
      %v358 = vunpack.c.l.b16 %v201
      %v359 = vunpack.c.l.b16 %v202
      %v360 = vunpack.c.l.b16 %v203
      %v361 = vunpack.c.l.b16 %v204
      %v362 = vunpack.c.l.b16 %v205
      %v363 = vunpack.c.l.b16 %v206
      %v364 = vunpack.c.l.b16 %v207
      %v365 = vunpack.c.l.b16 %v208
      %v366 = vunpack.c.l.b16 %v209
      %v367 = vunpack.c.l.b16 %v210
      %v368 = vunpack.c.l.b16 %v211
      %v369 = vunpack.c.l.b16 %v212
      %v370 = vunpack.c.l.b16 %v213
      %v371 = vunpack.c.l.b16 %v214
      %v372 = vunpack.c.l.b16 %v215
      %v373 = vunpack.c.l.b16 %v216
      %v374 = vunpack.c.l.b16 %v217
      %v375 = vunpack.c.l.b16 %v218
      %v376 = vunpack.c.l.b16 %v219
      %v377 = vunpack.c.l.b16 %v220
      %v378 = vunpack.c.l.b16 %v221
      %v379 = vunpack.c.l.b16 %v222
      %v380 = vunpack.c.l.b16 %v223
      %v381 = vunpack.c.l.b16 %v224
      %v382 = vunpack.c.l.b16 %v225
      %v383 = vunpack.c.l.b16 %v226
      %v384 = vunpack.c.l.b16 %v227
      %v385 = vunpack.c.l.b16 %v228
      %v386 = vunpack.c.l.b16 %v229
      %v387 = vunpack.c.l.b16 %v230
      %v388 = vunpack.c.l.b16 %v231
      %v389 = vunpack.c.l.b16 %v232
      %v390 = vunpack.c.l.b16 %v233
      %v391 = vunpack.c.l.b16 %v234
      %v392 = vpack.c.b16 %v329, %v328
      %v393 = vpack.c.b16 %v331, %v330
      %v394 = vpack.c.b16 %v333, %v332
      %v395 = vpack.c.b16 %v335, %v334
      %v396 = vpack.c.b16 %v337, %v336
      %v397 = vpack.c.b16 %v339, %v338
      %v398 = vpack.c.b16 %v341, %v340
      %v399 = vpack.c.b16 %v343, %v342
      %v400 = vpack.c.b16 %v345, %v344
      %v401 = vpack.c.b16 %v347, %v346
      %v402 = vpack.c.b16 %v349, %v348
      %v403 = vpack.c.b16 %v351, %v350
      %v404 = vpack.c.b16 %v353, %v352
      %v405 = vpack.c.b16 %v355, %v354
      %v406 = vpack.c.b16 %v357, %v356
      %v407 = vpack.c.b16 %v359, %v358
      %v408 = vpack.c.b16 %v361, %v360
      %v409 = vpack.c.b16 %v363, %v362
      %v410 = vpack.c.b16 %v365, %v364
      %v411 = vpack.c.b16 %v367, %v366
      %v412 = vpack.c.b16 %v369, %v368
      %v413 = vpack.c.b16 %v371, %v370
      %v414 = vpack.c.b16 %v373, %v372
      %v415 = vpack.c.b16 %v375, %v374
      %v416 = vpack.c.b16 %v377, %v376
      %v417 = vpack.c.b16 %v379, %v378
      %v418 = vpack.c.b16 %v381, %v380
      %v419 = vpack.c.b16 %v383, %v382
      %v420 = vpack.c.b16 %v385, %v384
      %v421 = vpack.c.b16 %v387, %v386
      %v422 = vpack.c.b16 %v389, %v388
      %v423 = vpack.c.b16 %v391, %v390
      %456 = vmatprep.subr.bf16.mxu0 0
      %457 = vmatpush1.bf16.msra.mxu0 %v399
      %458 = vmatprep.subr.bf16.mxu0 0
      %459 = vmatpush1.bf16.msra.mxu0 %v398
      %460 = vmatprep.subr.bf16.mxu0 0
      %461 = vmatpush1.bf16.msra.mxu0 %v397
      %462 = vmatprep.subr.bf16.mxu0 0
      %463 = vmatpush1.bf16.msra.mxu0 %v396
      %464 = vmatprep.subr.bf16.mxu0 0
      %465 = vmatpush1.bf16.msra.mxu0 %v395
      %466 = vmatprep.subr.bf16.mxu0 0
      %467 = vmatpush1.bf16.msra.mxu0 %v394
      %468 = vmatprep.subr.bf16.mxu0 0
      %469 = vmatpush1.bf16.msra.mxu0 %v393
      %470 = vmatprep.subr.bf16.mxu0 0
      %471 = vmatpush1.bf16.msra.mxu0 %v392
      %472 = vmatprep.subr.bf16.mxu0 0
      %473 = vmatpush2.bf16.msra.mxu0 %v407
      %474 = vmatprep.subr.bf16.mxu0 0
      %475 = vmatpush2.bf16.msra.mxu0 %v406
      %476 = vmatprep.subr.bf16.mxu0 0
      %477 = vmatpush2.bf16.msra.mxu0 %v405
      %478 = vmatprep.subr.bf16.mxu0 0
      %479 = vmatpush2.bf16.msra.mxu0 %v404
      %480 = vmatprep.subr.bf16.mxu0 0
      %481 = vmatpush2.bf16.msra.mxu0 %v403
      %482 = vmatprep.subr.bf16.mxu0 0
      %483 = vmatpush2.bf16.msra.mxu0 %v402
      %484 = vmatprep.subr.bf16.mxu0 0
      %485 = vmatpush2.bf16.msra.mxu0 %v401
      %486 = vmatprep.subr.bf16.mxu0 0
      %487 = vmatpush2.bf16.msra.mxu0 %v400
      %488 = vmatprep.mubr.bf16.mxu0 %v258
      %489 = vmatmul.mubr.bf16.gmra.mxu0 %v250
      %v490 = vpop.f32.mrf.mxu0
      %v491 = vadd.f32 %v240, %v490
      %v492 = vpop.f32.mrf.mxu0
      %v493 = vpop.f32.mrf.mxu0
      %v494 = vpop.f32.mrf.mxu0
      %495 = vdwg.mxu0
      %496 = vmatprep.subr.bf16.mxu0 0
      %497 = vmatpush1.bf16.msra.mxu0 %v415
      %498 = vmatprep.subr.bf16.mxu0 0
      %499 = vmatpush1.bf16.msra.mxu0 %v414
      %500 = vmatprep.subr.bf16.mxu0 0
      %501 = vmatpush1.bf16.msra.mxu0 %v413
      %502 = vmatprep.subr.bf16.mxu0 0
      %503 = vmatpush1.bf16.msra.mxu0 %v412
      %504 = vmatprep.subr.bf16.mxu0 0
      %505 = vmatpush1.bf16.msra.mxu0 %v411
      %506 = vmatprep.subr.bf16.mxu0 0
      %507 = vmatpush1.bf16.msra.mxu0 %v410
      %508 = vmatprep.subr.bf16.mxu0 0
      %509 = vmatpush1.bf16.msra.mxu0 %v409
      %510 = vmatprep.subr.bf16.mxu0 0
      %511 = vmatpush1.bf16.msra.mxu0 %v408
      %512 = vmatprep.subr.bf16.mxu0 0
      %513 = vmatpush2.bf16.msra.mxu0 %v423
      %514 = vmatprep.subr.bf16.mxu0 0
      %515 = vmatpush2.bf16.msra.mxu0 %v422
      %516 = vmatprep.subr.bf16.mxu0 0
      %517 = vmatpush2.bf16.msra.mxu0 %v421
      %518 = vmatprep.subr.bf16.mxu0 0
      %519 = vmatpush2.bf16.msra.mxu0 %v420
      %520 = vmatprep.subr.bf16.mxu0 0
      %521 = vmatpush2.bf16.msra.mxu0 %v419
      %522 = vmatprep.subr.bf16.mxu0 0
      %523 = vmatpush2.bf16.msra.mxu0 %v418
      %524 = vmatprep.subr.bf16.mxu0 0
      %525 = vmatpush2.bf16.msra.mxu0 %v417
      %526 = vmatprep.subr.bf16.mxu0 0
      %527 = vmatpush2.bf16.msra.mxu0 %v416
      %528 = vmatprep.mubr.bf16.mxu0 %v259
      %529 = vmatmul.mubr.bf16.gmra.mxu0 %v257
      %v530 = vpop.f32.mrf.mxu0
      %v531 = vadd.f32 %v491, %v530
      %v532 = vpop.f32.mrf.mxu0
      %v533 = vpop.f32.mrf.mxu0
      %v534 = vpop.f32.mrf.mxu0
      %535 = vdwg.mxu0
      %vm536 = vcmp.ge.f32.partialorder %v531, 0.0
      %v537 = vmul.f32 %v531, 0.2
      %v538 = vsel %vm536, %v531, %v537
      %vm539 = vcmask 1043456
      %v540 = vsel %vm539, %v538, 0.0
      %v541 = vrot.slane %v540, 4
      %v542 = vadd.f32 %v540, %v541
      %v543 = vrot.slane %v542, 2
      %v544 = vadd.f32 %v542, %v543
      %v545 = vrot.slane %v544, 1
      %v546 = vadd.f32 %v544, %v545
      %v547 = vmul.f32 %v538, %v538
      %v548 = vsel %vm539, %v547, 0.0
      %v549 = vrot.slane %v548, 4
      %v550 = vadd.f32 %v548, %v549
      %v551 = vrot.slane %v550, 2
      %v552 = vadd.f32 %v550, %v551
      %v553 = vrot.slane %v552, 1
      %v554 = vadd.f32 %v552, %v553
      %v555 = vmul.f32 %v546, 0.25
      %v556 = vmul.f32 %v554, 0.25
      %v557 = vmul.f32 %v555, %v555
      %v558 = vsub.f32 %v556, %v557
      %v559 = vmax.f32 %v558, 0.0
      %v560 = vsub.f32 %v538, %v555
      %v561 = vadd.f32 %v559, 1e-05
      %v562 = vrsqrt.pop %v561
      %v563 = vmul.f32 %v560, %v562
      %564 = vst [vmem:[%s168] sm:$0xf] %v563
      %p565 = scmp.lt.s32.totalorder %s14, 1
      %s566 = scalar_select %p565, %s14, 1
      %s567 = smul.addr %s566, 4
      %s568 = scalar_lea.vmem %s3, %s567
      // Predicated region
      $region33: #{patch_dis_net_forward.8} parent=31 // pred_check
        %p569 = pneg %p100
      $region34: #{patch_dis_net_forward.8} parent=31 // pred_check_branch
        %571 = sbr.rel (%p569) target = $region36
      $region35: #{patch_dis_net_forward.8} parent=31 // pred_region
        _
      $region36: #{patch_dis_net_forward.8} parent=31 // pred_fallthru
        _
    $region32: #{patch_dis_net_forward.8} parent=5 // pred_fallthru
      _
    %p572 = scmp.le.s32.totalorder 2, %s9
    // Predicated region
    $region37: #{patch_dis_net_forward.8} parent=5 // pred_check
      %p573 = pneg %p572
    $region38: #{patch_dis_net_forward.8} parent=5 // pred_check_branch
      %575 = sbr.rel (%p573) target = $region40
    $region39: #{patch_dis_net_forward.8} parent=5 // pred_region
      %s576 = ssub.s32 %s9, 2
      // Predicated region
      $region41: #{patch_dis_net_forward.8} parent=39 // pred_check
        %p577 = pneg %p106
      $region42: #{patch_dis_net_forward.8} parent=39 // pred_check_branch
        %579 = sbr.rel (%p577) target = $region44
      $region43: #{patch_dis_net_forward.8} parent=39 // pred_region
        %p580 = scmp.lt.s32.totalorder %s15, 1
        %s581 = scalar_select %p580, %s15, 1
        %s582 = smul.addr %s581, 4
        %s583 = scalar_lea.vmem %s3, %s582
      $region44: #{patch_dis_net_forward.8} parent=39 // pred_fallthru
        _
    $region40: #{patch_dis_net_forward.8} parent=5 // pred_fallthru
      _
  $region6: #{patch_dis_net_forward.8} parent=0 // loop_footer
    %s13 = sadd.s32 1, %s9
  $region7: #{patch_dis_net_forward.8} parent=0 // loop_footer_branch
    %8 = sbr.rel target = $region3
  $region8: #{patch_dis_net_forward.8} parent=0 // loop_exit
    _

// kernel: patch_dis_net_forward.9
$region0: #{patch_dis_net_forward.9}
  #allocation0 [shape = 'u32[]', space=smem, size = 0x4, offset = 0x4, fixed_abs, tag = 'smem constant byte address 0x4 - core index']
  #allocation1 [shape = 'u32[144,128]{1,0:T(1,128)}', space=vmem, size = 0x12000, scoped, tag = 'internal scratch']
  %s0 = inlined_call_operand.vmem [shape: bf16[2,9,1024], index: 0, kind: input, shape index: {}]
  %s1 = inlined_call_operand.vmem [shape: bf16[1024,128], index: 1, kind: input, shape index: {}]
  %s2 = inlined_call_operand.vmem [shape: f32[1,128], index: 2, kind: input, shape index: {}]
  %s3 = inlined_call_operand.vmem [shape: f32[2,9,128], index: 3, kind: output, shape index: {}]
  %s4 = sld [smem:[#allocation0]]
  $region45: #{patch_dis_net_forward.9} parent=0
    _
  %s6 = ssub.s32 1, %s4
  %s7 = scalar_select 0, %s6, %s4
  loop: start=0, step=1, limit=4
  $region2: #{patch_dis_net_forward.9} parent=0 // loop_pre_header
    _
  $region3: #{patch_dis_net_forward.9} parent=0 // loop_header
    %s9 = sphi 0, %s13
    %p10 = scmp.ge.s32.totalorder %s9, 4
    %s19 = sphi 0, %s21
    %s22 = sphi 0, %s19
    %s23 = sphi 0, %s22
    %s39 = sphi 0, %s23
    %s43 = sphi 0, %s43
    %s45 = sphi 0, %s43
    %s46 = sphi 0, %s45
    %s60 = sphi 0, %s46
    %s64 = sphi 0, %s64
    %s66 = sphi 0, %s64
    %s67 = sphi 0, %s66
    %s81 = sphi 0, %s67
    %s87 = sphi 0, %s89
    %s90 = sphi 0, %s87
    %s91 = sphi 0, %s90
    %s107 = sphi 0, %s91
  $region4: #{patch_dis_net_forward.9} parent=0 // loop_header_branch
    %12 = sbr.rel (%p10) target = $region8
  $region5: #{patch_dis_net_forward.9} parent=0 // loop_body
    %s14 = ssub.s32 %s9, 1
    %s15 = ssub.s32 %s9, 2
    %s16 = sadd.s32 %s9, 1
    %s17 = ssub.s32 %s9, %s16
    %p18 = scmp.eq.s32.totalorder %s17, 0
    %s20 = sadd.s32 %s19, 1
    %s21 = scalar_select %p18, %s19, %s20
    %p24 = pneg %p18
    %p25 = scmp.eq.s32.totalorder %s9, 1
    %p26 = por %p24, %p25
    %p27 = scmp.ne.s32.totalorder %s19, %s22
    %p28 = scmp.eq.s32.totalorder %s9, 0
    %p29 = por %p27, %p28
    %p30 = scmp.ne.s32.totalorder %s19, %s22
    %p31 = scmp.eq.s32.totalorder %s14, 1
    %p32 = por %p30, %p31
    %p33 = scmp.ne.s32.totalorder %s22, %s23
    %p34 = scmp.eq.s32.totalorder %s14, 0
    %p35 = por %p33, %p34
    %p36 = scmp.ne.s32.totalorder %s22, %s23
    %p37 = scmp.eq.s32.totalorder %s15, 1
    %p38 = por %p36, %p37
    %p40 = scmp.ne.s32.totalorder %s23, %s39
    %p41 = scmp.eq.s32.totalorder %s15, 0
    %p42 = por %p40, %p41
    %s44 = sadd.s32 %s43, 1
    %p47 = scmp.eq.s32.totalorder %s9, 1
    %p48 = scmp.ne.s32.totalorder %s43, %s45
    %p49 = scmp.eq.s32.totalorder %s9, 0
    %p50 = por %p48, %p49
    %p51 = scmp.ne.s32.totalorder %s43, %s45
    %p52 = scmp.eq.s32.totalorder %s14, 1
    %p53 = por %p51, %p52
    %p54 = scmp.ne.s32.totalorder %s45, %s46
    %p55 = scmp.eq.s32.totalorder %s14, 0
    %p56 = por %p54, %p55
    %p57 = scmp.ne.s32.totalorder %s45, %s46
    %p58 = scmp.eq.s32.totalorder %s15, 1
    %p59 = por %p57, %p58
    %p61 = scmp.ne.s32.totalorder %s46, %s60
    %p62 = scmp.eq.s32.totalorder %s15, 0
    %p63 = por %p61, %p62
    %s65 = sadd.s32 %s64, 1
    %p68 = scmp.eq.s32.totalorder %s9, 1
    %p69 = scmp.ne.s32.totalorder %s64, %s66
    %p70 = scmp.eq.s32.totalorder %s9, 0
    %p71 = por %p69, %p70
    %p72 = scmp.ne.s32.totalorder %s64, %s66
    %p73 = scmp.eq.s32.totalorder %s14, 1
    %p74 = por %p72, %p73
    %p75 = scmp.ne.s32.totalorder %s66, %s67
    %p76 = scmp.eq.s32.totalorder %s14, 0
    %p77 = por %p75, %p76
    %p78 = scmp.ne.s32.totalorder %s66, %s67
    %p79 = scmp.eq.s32.totalorder %s15, 1
    %p80 = por %p78, %p79
    %p82 = scmp.ne.s32.totalorder %s67, %s81
    %p83 = scmp.eq.s32.totalorder %s15, 0
    %p84 = por %p82, %p83
    %s85 = ssub.s32 %s9, %s16
    %p86 = scmp.eq.s32.totalorder %s85, 0
    %s88 = sadd.s32 %s87, 1
    %s89 = scalar_select %p86, %s87, %s88
    %p92 = pneg %p86
    %p93 = scmp.eq.s32.totalorder %s9, 1
    %p94 = por %p92, %p93
    %p95 = scmp.ne.s32.totalorder %s87, %s90
    %p96 = scmp.eq.s32.totalorder %s9, 0
    %p97 = por %p95, %p96
    %p98 = scmp.ne.s32.totalorder %s87, %s90
    %p99 = scmp.eq.s32.totalorder %s14, 1
    %p100 = por %p98, %p99
    %p101 = scmp.ne.s32.totalorder %s90, %s91
    %p102 = scmp.eq.s32.totalorder %s14, 0
    %p103 = por %p101, %p102
    %p104 = scmp.ne.s32.totalorder %s90, %s91
    %p105 = scmp.eq.s32.totalorder %s15, 1
    %p106 = por %p104, %p105
    %p108 = scmp.ne.s32.totalorder %s91, %s107
    %p109 = scmp.eq.s32.totalorder %s15, 0
    %p110 = por %p108, %p109
    %p111 = scmp.le.s32.totalorder 1, %s9
    %p112 = scmp.lt.s32.totalorder %s9, 3
    %p113 = pnand %p111, %p112
    %p114 = pneg %p113
    // Predicated region
    $region9: #{patch_dis_net_forward.9} parent=5 // pred_check
      _
    $region10: #{patch_dis_net_forward.9} parent=5 // pred_check_branch
      %116 = sbr.rel (%p113) target = $region12
    $region11: #{patch_dis_net_forward.9} parent=5 // pred_region
      %s117 = ssub.s32 %s9, 1
      // Predicated region
      $region13: #{patch_dis_net_forward.9} parent=11 // pred_check
        %p118 = pneg %p56
      $region14: #{patch_dis_net_forward.9} parent=11 // pred_check_branch
        %120 = sbr.rel (%p118) target = $region16
      $region15: #{patch_dis_net_forward.9} parent=11 // pred_region
        _
      $region16: #{patch_dis_net_forward.9} parent=11 // pred_fallthru
        _
      // Predicated region
      $region17: #{patch_dis_net_forward.9} parent=11 // pred_check
        %p121 = pneg %p77
      $region18: #{patch_dis_net_forward.9} parent=11 // pred_check_branch
        %123 = sbr.rel (%p121) target = $region20
      $region19: #{patch_dis_net_forward.9} parent=11 // pred_region
        _
      $region20: #{patch_dis_net_forward.9} parent=11 // pred_fallthru
        _
    $region12: #{patch_dis_net_forward.9} parent=5 // pred_fallthru
      _
    %p124 = scmp.lt.s32.totalorder %s9, 2
    // Predicated region
    $region21: #{patch_dis_net_forward.9} parent=5 // pred_check
      %p125 = pneg %p124
    $region22: #{patch_dis_net_forward.9} parent=5 // pred_check_branch
      %127 = sbr.rel (%p125) target = $region24
    $region23: #{patch_dis_net_forward.9} parent=5 // pred_region
      // Predicated region
      $region25: #{patch_dis_net_forward.9} parent=23 // pred_check
        %p128 = pneg %p29
      $region26: #{patch_dis_net_forward.9} parent=23 // pred_check_branch
        %130 = sbr.rel (%p128) target = $region28
      $region27: #{patch_dis_net_forward.9} parent=23 // pred_region
        %p131 = scmp.lt.s32.totalorder %s9, 1
        %s132 = scalar_select %p131, %s9, 1
        %s133 = smul.addr %s132, 16
        %s134 = smul.addr %s133, 4
        %s135 = scalar_lea.vmem %s0, %s134
      $region28: #{patch_dis_net_forward.9} parent=23 // pred_fallthru
        _
    $region24: #{patch_dis_net_forward.9} parent=5 // pred_fallthru
      _
    %p136 = scmp.le.s32.totalorder 1, %s9
    %p137 = scmp.lt.s32.totalorder %s9, 3
    %p138 = pnand %p136, %p137
    %p139 = pneg %p138
    // Predicated region
    $region29: #{patch_dis_net_forward.9} parent=5 // pred_check
      _
    $region30: #{patch_dis_net_forward.9} parent=5 // pred_check_branch
      %141 = sbr.rel (%p138) target = $region32
    $region31: #{patch_dis_net_forward.9} parent=5 // pred_region
      %s142 = ssub.s32 %s9, 1
      %p143 = scmp.lt.s32.totalorder %s14, 1
      %s144 = scalar_select %p143, %s14, 1
      %s145 = smul.addr %s144, 16
      %s146 = smul.addr %s145, 4
      %s147 = scalar_lea.vmem %s0, %s146
      %p148 = pneg %p35
      %p149 = pneg %p32
      %p150 = pneg %p56
      %p151 = pneg %p53
      %p152 = pneg %p77
      %p153 = pneg %p74
      %p154 = pneg %p103
      %p155 = pneg %p100
      %p156 = scmp.lt.s32.totalorder %s14, 1
      %s157 = scalar_select %p156, %s14, 1
      %s158 = smul.addr %s157, 2
      %s159 = smul.addr %s158, 8
      %s160 = scalar_lea.vmem %s3, %s159
      %p161 = scmp.lt.s32.totalorder %s14, 1
      %s162 = scalar_select %p161, %s14, 1
      %s163 = smul.addr %s162, 16
      %s164 = smul.addr %s163, 4
      %s165 = scalar_lea.vmem %s0, %s164
      %p166 = scmp.lt.s32.totalorder %s14, 1
      %s167 = scalar_select %p166, %s14, 1
      %s168 = smul.addr %s167, 2
      %s169 = smul.addr %s168, 8
      %s170 = scalar_lea.vmem %s3, %s169
      %v172 = vld [vmem:[%s165] sm:$0xff]
      %v173 = vld [vmem:[%s165 + $0x8] sm:$0xff]
      %v174 = vld [vmem:[%s165 + $0x10] sm:$0xff]
      %v175 = vld [vmem:[%s165 + $0x18] sm:$0xff]
      %v176 = vld [vmem:[%s165 + $0x20] sm:$0x11]
      %v177 = vld [vmem:[%s165 + $0x28] sm:$0x11]
      %v178 = vld [vmem:[%s165 + $0x30] sm:$0x11]
      %v179 = vld [vmem:[%s165 + $0x38] sm:$0x11]
      %v180 = vld [vmem:[%s1] sm:$0xf]
      %v181 = vld [vmem:[%s1 + $0x4] sm:$0xf]
      %v182 = vld [vmem:[%s1 + $0x8] sm:$0xf]
      %v183 = vld [vmem:[%s1 + $0xc] sm:$0xf]
      %v184 = vld [vmem:[%s1 + $0x10] sm:$0xf]
      %v185 = vld [vmem:[%s1 + $0x14] sm:$0xf]
      %v186 = vld [vmem:[%s1 + $0x18] sm:$0xf]
      %v187 = vld [vmem:[%s1 + $0x1c] sm:$0xf]
      %v188 = vld [vmem:[%s1 + $0x20] sm:$0xf]
      %v189 = vld [vmem:[%s1 + $0x24] sm:$0xf]
      %v190 = vld [vmem:[%s1 + $0x28] sm:$0xf]
      %v191 = vld [vmem:[%s1 + $0x2c] sm:$0xf]
      %v192 = vld [vmem:[%s1 + $0x30] sm:$0xf]
      %v193 = vld [vmem:[%s1 + $0x34] sm:$0xf]
      %v194 = vld [vmem:[%s1 + $0x38] sm:$0xf]
      %v195 = vld [vmem:[%s1 + $0x3c] sm:$0xf]
      %v196 = vld [vmem:[%s1 + $0x40] sm:$0xf]
      %v197 = vld [vmem:[%s1 + $0x44] sm:$0xf]
      %v198 = vld [vmem:[%s1 + $0x48] sm:$0xf]
      %v199 = vld [vmem:[%s1 + $0x4c] sm:$0xf]
      %v200 = vld [vmem:[%s1 + $0x50] sm:$0xf]
      %v201 = vld [vmem:[%s1 + $0x54] sm:$0xf]
      %v202 = vld [vmem:[%s1 + $0x58] sm:$0xf]
      %v203 = vld [vmem:[%s1 + $0x5c] sm:$0xf]
      %v204 = vld [vmem:[%s1 + $0x60] sm:$0xf]
      %v205 = vld [vmem:[%s1 + $0x64] sm:$0xf]
      %v206 = vld [vmem:[%s1 + $0x68] sm:$0xf]
      %v207 = vld [vmem:[%s1 + $0x6c] sm:$0xf]
      %v208 = vld [vmem:[%s1 + $0x70] sm:$0xf]
      %v209 = vld [vmem:[%s1 + $0x74] sm:$0xf]
      %v210 = vld [vmem:[%s1 + $0x78] sm:$0xf]
      %v211 = vld [vmem:[%s1 + $0x7c] sm:$0xf]
      %v212 = vld [vmem:[%s1 + $0x80] sm:$0xf]
      %v213 = vld [vmem:[%s1 + $0x84] sm:$0xf]
      %v214 = vld [vmem:[%s1 + $0x88] sm:$0xf]
      %v215 = vld [vmem:[%s1 + $0x8c] sm:$0xf]
      %v216 = vld [vmem:[%s1 + $0x90] sm:$0xf]
      %v217 = vld [vmem:[%s1 + $0x94] sm:$0xf]
      %v218 = vld [vmem:[%s1 + $0x98] sm:$0xf]
      %v219 = vld [vmem:[%s1 + $0x9c] sm:$0xf]
      %v220 = vld [vmem:[%s1 + $0xa0] sm:$0xf]
      %v221 = vld [vmem:[%s1 + $0xa4] sm:$0xf]
      %v222 = vld [vmem:[%s1 + $0xa8] sm:$0xf]
      %v223 = vld [vmem:[%s1 + $0xac] sm:$0xf]
      %v224 = vld [vmem:[%s1 + $0xb0] sm:$0xf]
      %v225 = vld [vmem:[%s1 + $0xb4] sm:$0xf]
      %v226 = vld [vmem:[%s1 + $0xb8] sm:$0xf]
      %v227 = vld [vmem:[%s1 + $0xbc] sm:$0xf]
      %v228 = vld [vmem:[%s1 + $0xc0] sm:$0xf]
      %v229 = vld [vmem:[%s1 + $0xc4] sm:$0xf]
      %v230 = vld [vmem:[%s1 + $0xc8] sm:$0xf]
      %v231 = vld [vmem:[%s1 + $0xcc] sm:$0xf]
      %v232 = vld [vmem:[%s1 + $0xd0] sm:$0xf]
      %v233 = vld [vmem:[%s1 + $0xd4] sm:$0xf]
      %v234 = vld [vmem:[%s1 + $0xd8] sm:$0xf]
      %v235 = vld [vmem:[%s1 + $0xdc] sm:$0xf]
      %v236 = vld [vmem:[%s1 + $0xe0] sm:$0xf]
      %v237 = vld [vmem:[%s1 + $0xe4] sm:$0xf]
      %v238 = vld [vmem:[%s1 + $0xe8] sm:$0xf]
      %v239 = vld [vmem:[%s1 + $0xec] sm:$0xf]
      %v240 = vld [vmem:[%s1 + $0xf0] sm:$0xf]
      %v241 = vld [vmem:[%s1 + $0xf4] sm:$0xf]
      %v242 = vld [vmem:[%s1 + $0xf8] sm:$0xf]
      %v243 = vld [vmem:[%s1 + $0xfc] sm:$0xf]
      %v244 = vld [vmem:[%s1 + $0x100] sm:$0xf]
      %v245 = vld [vmem:[%s1 + $0x104] sm:$0xf]
      %v246 = vld [vmem:[%s1 + $0x108] sm:$0xf]
      %v247 = vld [vmem:[%s1 + $0x10c] sm:$0xf]
      %v248 = vld [vmem:[%s1 + $0x110] sm:$0xf]
      %v249 = vld [vmem:[%s1 + $0x114] sm:$0xf]
      %v250 = vld [vmem:[%s1 + $0x118] sm:$0xf]
      %v251 = vld [vmem:[%s1 + $0x11c] sm:$0xf]
      %v252 = vld [vmem:[%s1 + $0x120] sm:$0xf]
      %v253 = vld [vmem:[%s1 + $0x124] sm:$0xf]
      %v254 = vld [vmem:[%s1 + $0x128] sm:$0xf]
      %v255 = vld [vmem:[%s1 + $0x12c] sm:$0xf]
      %v256 = vld [vmem:[%s1 + $0x130] sm:$0xf]
      %v257 = vld [vmem:[%s1 + $0x134] sm:$0xf]
      %v258 = vld [vmem:[%s1 + $0x138] sm:$0xf]
      %v259 = vld [vmem:[%s1 + $0x13c] sm:$0xf]
      %v260 = vld [vmem:[%s1 + $0x140] sm:$0xf]
      %v261 = vld [vmem:[%s1 + $0x144] sm:$0xf]
      %v262 = vld [vmem:[%s1 + $0x148] sm:$0xf]
      %v263 = vld [vmem:[%s1 + $0x14c] sm:$0xf]
      %v264 = vld [vmem:[%s1 + $0x150] sm:$0xf]
      %v265 = vld [vmem:[%s1 + $0x154] sm:$0xf]
      %v266 = vld [vmem:[%s1 + $0x158] sm:$0xf]
      %v267 = vld [vmem:[%s1 + $0x15c] sm:$0xf]
      %v268 = vld [vmem:[%s1 + $0x160] sm:$0xf]
      %v269 = vld [vmem:[%s1 + $0x164] sm:$0xf]
      %v270 = vld [vmem:[%s1 + $0x168] sm:$0xf]
      %v271 = vld [vmem:[%s1 + $0x16c] sm:$0xf]
      %v272 = vld [vmem:[%s1 + $0x170] sm:$0xf]
      %v273 = vld [vmem:[%s1 + $0x174] sm:$0xf]
      %v274 = vld [vmem:[%s1 + $0x178] sm:$0xf]
      %v275 = vld [vmem:[%s1 + $0x17c] sm:$0xf]
      %v276 = vld [vmem:[%s1 + $0x180] sm:$0xf]
      %v277 = vld [vmem:[%s1 + $0x184] sm:$0xf]
      %v278 = vld [vmem:[%s1 + $0x188] sm:$0xf]
      %v279 = vld [vmem:[%s1 + $0x18c] sm:$0xf]
      %v280 = vld [vmem:[%s1 + $0x190] sm:$0xf]
      %v281 = vld [vmem:[%s1 + $0x194] sm:$0xf]
      %v282 = vld [vmem:[%s1 + $0x198] sm:$0xf]
      %v283 = vld [vmem:[%s1 + $0x19c] sm:$0xf]
      %v284 = vld [vmem:[%s1 + $0x1a0] sm:$0xf]
      %v285 = vld [vmem:[%s1 + $0x1a4] sm:$0xf]
      %v286 = vld [vmem:[%s1 + $0x1a8] sm:$0xf]
      %v287 = vld [vmem:[%s1 + $0x1ac] sm:$0xf]
      %v288 = vld [vmem:[%s1 + $0x1b0] sm:$0xf]
      %v289 = vld [vmem:[%s1 + $0x1b4] sm:$0xf]
      %v290 = vld [vmem:[%s1 + $0x1b8] sm:$0xf]
      %v291 = vld [vmem:[%s1 + $0x1bc] sm:$0xf]
      %v292 = vld [vmem:[%s1 + $0x1c0] sm:$0xf]
      %v293 = vld [vmem:[%s1 + $0x1c4] sm:$0xf]
      %v294 = vld [vmem:[%s1 + $0x1c8] sm:$0xf]
      %v295 = vld [vmem:[%s1 + $0x1cc] sm:$0xf]
      %v296 = vld [vmem:[%s1 + $0x1d0] sm:$0xf]
      %v297 = vld [vmem:[%s1 + $0x1d4] sm:$0xf]
      %v298 = vld [vmem:[%s1 + $0x1d8] sm:$0xf]
      %v299 = vld [vmem:[%s1 + $0x1dc] sm:$0xf]
      %v300 = vld [vmem:[%s1 + $0x1e0] sm:$0xf]
      %v301 = vld [vmem:[%s1 + $0x1e4] sm:$0xf]
      %v302 = vld [vmem:[%s1 + $0x1e8] sm:$0xf]
      %v303 = vld [vmem:[%s1 + $0x1ec] sm:$0xf]
      %v304 = vld [vmem:[%s1 + $0x1f0] sm:$0xf]
      %v305 = vld [vmem:[%s1 + $0x1f4] sm:$0xf]
      %v306 = vld [vmem:[%s1 + $0x1f8] sm:$0xf]
      %v307 = vld [vmem:[%s1 + $0x1fc] sm:$0xf]
      %v308 = vld [vmem:[%s2] sm:$0x1]
      %v310 = vlaneseq
      %v311 = vshrl.u32 %v310, 7
      %v312 = vsub.s32 0, %v311
      %v313 = vrot.slane %v308, %v312
      %v323 = vunpack.c.l.b16 %v172
      %v324 = vunpack.c.h.b16 %v172
      %v325 = vunpack.c.l.b16 %v173
      %v326 = vunpack.c.h.b16 %v173
      %v327 = vunpack.c.l.b16 %v174
      %v328 = vunpack.c.h.b16 %v174
      %v329 = vunpack.c.l.b16 %v175
      %v330 = vunpack.c.h.b16 %v175
      %v331 = vunpack.c.l.b16 %v176
      %v332 = vunpack.c.h.b16 %v176
      %v333 = vunpack.c.l.b16 %v177
      %v334 = vunpack.c.h.b16 %v177
      %v335 = vunpack.c.l.b16 %v178
      %v336 = vunpack.c.h.b16 %v178
      %v337 = vunpack.c.l.b16 %v179
      %v338 = vunpack.c.h.b16 %v179
      %v339 = vpack.c.b16 %v331, %v323
      %v340 = vpack.c.b16 %v332, %v324
      %v341 = vpack.c.b16 %v333, %v325
      %v342 = vpack.c.b16 %v334, %v326
      %v343 = vpack.c.b16 %v335, %v327
      %v344 = vpack.c.b16 %v336, %v328
      %v345 = vpack.c.b16 %v337, %v329
      %v346 = vpack.c.b16 %v338, %v330
      %v483 = vunpack.c.l.b16 %v180
      %v484 = vunpack.c.l.b16 %v181
      %v485 = vunpack.c.l.b16 %v182
      %v486 = vunpack.c.l.b16 %v183
      %v487 = vunpack.c.l.b16 %v184
      %v488 = vunpack.c.l.b16 %v185
      %v489 = vunpack.c.l.b16 %v186
      %v490 = vunpack.c.l.b16 %v187
      %v491 = vunpack.c.l.b16 %v188
      %v492 = vunpack.c.l.b16 %v189
      %v493 = vunpack.c.l.b16 %v190
      %v494 = vunpack.c.l.b16 %v191
      %v495 = vunpack.c.l.b16 %v192
      %v496 = vunpack.c.l.b16 %v193
      %v497 = vunpack.c.l.b16 %v194
      %v498 = vunpack.c.l.b16 %v195
      %v499 = vunpack.c.l.b16 %v196
      %v500 = vunpack.c.l.b16 %v197
      %v501 = vunpack.c.l.b16 %v198
      %v502 = vunpack.c.l.b16 %v199
      %v503 = vunpack.c.l.b16 %v200
      %v504 = vunpack.c.l.b16 %v201
      %v505 = vunpack.c.l.b16 %v202
      %v506 = vunpack.c.l.b16 %v203
      %v507 = vunpack.c.l.b16 %v204
      %v508 = vunpack.c.l.b16 %v205
      %v509 = vunpack.c.l.b16 %v206
      %v510 = vunpack.c.l.b16 %v207
      %v511 = vunpack.c.l.b16 %v208
      %v512 = vunpack.c.l.b16 %v209
      %v513 = vunpack.c.l.b16 %v210
      %v514 = vunpack.c.l.b16 %v211
      %v515 = vunpack.c.l.b16 %v212
      %v516 = vunpack.c.l.b16 %v213
      %v517 = vunpack.c.l.b16 %v214
      %v518 = vunpack.c.l.b16 %v215
      %v519 = vunpack.c.l.b16 %v216
      %v520 = vunpack.c.l.b16 %v217
      %v521 = vunpack.c.l.b16 %v218
      %v522 = vunpack.c.l.b16 %v219
      %v523 = vunpack.c.l.b16 %v220
      %v524 = vunpack.c.l.b16 %v221
      %v525 = vunpack.c.l.b16 %v222
      %v526 = vunpack.c.l.b16 %v223
      %v527 = vunpack.c.l.b16 %v224
      %v528 = vunpack.c.l.b16 %v225
      %v529 = vunpack.c.l.b16 %v226
      %v530 = vunpack.c.l.b16 %v227
      %v531 = vunpack.c.l.b16 %v228
      %v532 = vunpack.c.l.b16 %v229
      %v533 = vunpack.c.l.b16 %v230
      %v534 = vunpack.c.l.b16 %v231
      %v535 = vunpack.c.l.b16 %v232
      %v536 = vunpack.c.l.b16 %v233
      %v537 = vunpack.c.l.b16 %v234
      %v538 = vunpack.c.l.b16 %v235
      %v539 = vunpack.c.l.b16 %v236
      %v540 = vunpack.c.l.b16 %v237
      %v541 = vunpack.c.l.b16 %v238
      %v542 = vunpack.c.l.b16 %v239
      %v543 = vunpack.c.l.b16 %v240
      %v544 = vunpack.c.l.b16 %v241
      %v545 = vunpack.c.l.b16 %v242
      %v546 = vunpack.c.l.b16 %v243
      %v547 = vunpack.c.l.b16 %v244
      %v548 = vunpack.c.l.b16 %v245
      %v549 = vunpack.c.l.b16 %v246
      %v550 = vunpack.c.l.b16 %v247
      %v551 = vunpack.c.l.b16 %v248
      %v552 = vunpack.c.l.b16 %v249
      %v553 = vunpack.c.l.b16 %v250
      %v554 = vunpack.c.l.b16 %v251
      %v555 = vunpack.c.l.b16 %v252
      %v556 = vunpack.c.l.b16 %v253
      %v557 = vunpack.c.l.b16 %v254
      %v558 = vunpack.c.l.b16 %v255
      %v559 = vunpack.c.l.b16 %v256
      %v560 = vunpack.c.l.b16 %v257
      %v561 = vunpack.c.l.b16 %v258
      %v562 = vunpack.c.l.b16 %v259
      %v563 = vunpack.c.l.b16 %v260
      %v564 = vunpack.c.l.b16 %v261
      %v565 = vunpack.c.l.b16 %v262
      %v566 = vunpack.c.l.b16 %v263
      %v567 = vunpack.c.l.b16 %v264
      %v568 = vunpack.c.l.b16 %v265
      %v569 = vunpack.c.l.b16 %v266
      %v570 = vunpack.c.l.b16 %v267
      %v571 = vunpack.c.l.b16 %v268
      %v572 = vunpack.c.l.b16 %v269
      %v573 = vunpack.c.l.b16 %v270
      %v574 = vunpack.c.l.b16 %v271
      %v575 = vunpack.c.l.b16 %v272
      %v576 = vunpack.c.l.b16 %v273
      %v577 = vunpack.c.l.b16 %v274
      %v578 = vunpack.c.l.b16 %v275
      %v579 = vunpack.c.l.b16 %v276
      %v580 = vunpack.c.l.b16 %v277
      %v581 = vunpack.c.l.b16 %v278
      %v582 = vunpack.c.l.b16 %v279
      %v583 = vunpack.c.l.b16 %v280
      %v584 = vunpack.c.l.b16 %v281
      %v585 = vunpack.c.l.b16 %v282
      %v586 = vunpack.c.l.b16 %v283
      %v587 = vunpack.c.l.b16 %v284
      %v588 = vunpack.c.l.b16 %v285
      %v589 = vunpack.c.l.b16 %v286
      %v590 = vunpack.c.l.b16 %v287
      %v591 = vunpack.c.l.b16 %v288
      %v592 = vunpack.c.l.b16 %v289
      %v593 = vunpack.c.l.b16 %v290
      %v594 = vunpack.c.l.b16 %v291
      %v595 = vunpack.c.l.b16 %v292
      %v596 = vunpack.c.l.b16 %v293
      %v597 = vunpack.c.l.b16 %v294
      %v598 = vunpack.c.l.b16 %v295
      %v599 = vunpack.c.l.b16 %v296
      %v600 = vunpack.c.l.b16 %v297
      %v601 = vunpack.c.l.b16 %v298
      %v602 = vunpack.c.l.b16 %v299
      %v603 = vunpack.c.l.b16 %v300
      %v604 = vunpack.c.l.b16 %v301
      %v605 = vunpack.c.l.b16 %v302
      %v606 = vunpack.c.l.b16 %v303
      %v607 = vunpack.c.l.b16 %v304
      %v608 = vunpack.c.l.b16 %v305
      %v609 = vunpack.c.l.b16 %v306
      %v610 = vunpack.c.l.b16 %v307
      %v611 = vpack.c.b16 %v484, %v483
      %v612 = vpack.c.b16 %v486, %v485
      %v613 = vpack.c.b16 %v488, %v487
      %v614 = vpack.c.b16 %v490, %v489
      %v615 = vpack.c.b16 %v492, %v491
      %v616 = vpack.c.b16 %v494, %v493
      %v617 = vpack.c.b16 %v496, %v495
      %v618 = vpack.c.b16 %v498, %v497
      %v619 = vpack.c.b16 %v500, %v499
      %v620 = vpack.c.b16 %v502, %v501
      %v621 = vpack.c.b16 %v504, %v503
      %v622 = vpack.c.b16 %v506, %v505
      %v623 = vpack.c.b16 %v508, %v507
      %v624 = vpack.c.b16 %v510, %v509
      %v625 = vpack.c.b16 %v512, %v511
      %v626 = vpack.c.b16 %v514, %v513
      %v627 = vpack.c.b16 %v516, %v515
      %v628 = vpack.c.b16 %v518, %v517
      %v629 = vpack.c.b16 %v520, %v519
      %v630 = vpack.c.b16 %v522, %v521
      %v631 = vpack.c.b16 %v524, %v523
      %v632 = vpack.c.b16 %v526, %v525
      %v633 = vpack.c.b16 %v528, %v527
      %v634 = vpack.c.b16 %v530, %v529
      %v635 = vpack.c.b16 %v532, %v531
      %v636 = vpack.c.b16 %v534, %v533
      %v637 = vpack.c.b16 %v536, %v535
      %v638 = vpack.c.b16 %v538, %v537
      %v639 = vpack.c.b16 %v540, %v539
      %v640 = vpack.c.b16 %v542, %v541
      %v641 = vpack.c.b16 %v544, %v543
      %v642 = vpack.c.b16 %v546, %v545
      %v643 = vpack.c.b16 %v548, %v547
      %v644 = vpack.c.b16 %v550, %v549
      %v645 = vpack.c.b16 %v552, %v551
      %v646 = vpack.c.b16 %v554, %v553
      %v647 = vpack.c.b16 %v556, %v555
      %v648 = vpack.c.b16 %v558, %v557
      %v649 = vpack.c.b16 %v560, %v559
      %v650 = vpack.c.b16 %v562, %v561
      %v651 = vpack.c.b16 %v564, %v563
      %v652 = vpack.c.b16 %v566, %v565
      %v653 = vpack.c.b16 %v568, %v567
      %v654 = vpack.c.b16 %v570, %v569
      %v655 = vpack.c.b16 %v572, %v571
      %v656 = vpack.c.b16 %v574, %v573
      %v657 = vpack.c.b16 %v576, %v575
      %v658 = vpack.c.b16 %v578, %v577
      %v659 = vpack.c.b16 %v580, %v579
      %v660 = vpack.c.b16 %v582, %v581
      %v661 = vpack.c.b16 %v584, %v583
      %v662 = vpack.c.b16 %v586, %v585
      %v663 = vpack.c.b16 %v588, %v587
      %v664 = vpack.c.b16 %v590, %v589
      %v665 = vpack.c.b16 %v592, %v591
      %v666 = vpack.c.b16 %v594, %v593
      %v667 = vpack.c.b16 %v596, %v595
      %v668 = vpack.c.b16 %v598, %v597
      %v669 = vpack.c.b16 %v600, %v599
      %v670 = vpack.c.b16 %v602, %v601
      %v671 = vpack.c.b16 %v604, %v603
      %v672 = vpack.c.b16 %v606, %v605
      %v673 = vpack.c.b16 %v608, %v607
      %v674 = vpack.c.b16 %v610, %v609
      %739 = vmatprep.subr.bf16.mxu0 0
      %740 = vmatpush1.bf16.msra.mxu0 %v618
      %741 = vmatprep.subr.bf16.mxu0 0
      %742 = vmatpush1.bf16.msra.mxu0 %v617
      %743 = vmatprep.subr.bf16.mxu0 0
      %744 = vmatpush1.bf16.msra.mxu0 %v616
      %745 = vmatprep.subr.bf16.mxu0 0
      %746 = vmatpush1.bf16.msra.mxu0 %v615
      %747 = vmatprep.subr.bf16.mxu0 0
      %748 = vmatpush1.bf16.msra.mxu0 %v614
      %749 = vmatprep.subr.bf16.mxu0 0
      %750 = vmatpush1.bf16.msra.mxu0 %v613
      %751 = vmatprep.subr.bf16.mxu0 0
      %752 = vmatpush1.bf16.msra.mxu0 %v612
      %753 = vmatprep.subr.bf16.mxu0 0
      %754 = vmatpush1.bf16.msra.mxu0 %v611
      %755 = vmatprep.subr.bf16.mxu0 0
      %756 = vmatpush2.bf16.msra.mxu0 %v626
      %757 = vmatprep.subr.bf16.mxu0 0
      %758 = vmatpush2.bf16.msra.mxu0 %v625
      %759 = vmatprep.subr.bf16.mxu0 0
      %760 = vmatpush2.bf16.msra.mxu0 %v624
      %761 = vmatprep.subr.bf16.mxu0 0
      %762 = vmatpush2.bf16.msra.mxu0 %v623
      %763 = vmatprep.subr.bf16.mxu0 0
      %764 = vmatpush2.bf16.msra.mxu0 %v622
      %765 = vmatprep.subr.bf16.mxu0 0
      %766 = vmatpush2.bf16.msra.mxu0 %v621
      %767 = vmatprep.subr.bf16.mxu0 0
      %768 = vmatpush2.bf16.msra.mxu0 %v620
      %769 = vmatprep.subr.bf16.mxu0 0
      %770 = vmatpush2.bf16.msra.mxu0 %v619
      %771 = vmatprep.mubr.bf16.mxu0 %v340
      %772 = vmatmul.mubr.bf16.gmra.mxu0 %v339
      %v773 = vpop.f32.mrf.mxu0
      %v774 = vadd.f32 %v313, %v773
      %v775 = vpop.f32.mrf.mxu0
      %v776 = vpop.f32.mrf.mxu0
      %v777 = vadd.f32 %v313, %v776
      %v778 = vpop.f32.mrf.mxu0
      %779 = vdwg.mxu0
      %780 = vmatprep.subr.bf16.mxu0 0
      %781 = vmatpush1.bf16.msra.mxu0 %v634
      %782 = vmatprep.subr.bf16.mxu0 0
      %783 = vmatpush1.bf16.msra.mxu0 %v633
      %784 = vmatprep.subr.bf16.mxu0 0
      %785 = vmatpush1.bf16.msra.mxu0 %v632
      %786 = vmatprep.subr.bf16.mxu0 0
      %787 = vmatpush1.bf16.msra.mxu0 %v631
      %788 = vmatprep.subr.bf16.mxu0 0
      %789 = vmatpush1.bf16.msra.mxu0 %v630
      %790 = vmatprep.subr.bf16.mxu0 0
      %791 = vmatpush1.bf16.msra.mxu0 %v629
      %792 = vmatprep.subr.bf16.mxu0 0
      %793 = vmatpush1.bf16.msra.mxu0 %v628
      %794 = vmatprep.subr.bf16.mxu0 0
      %795 = vmatpush1.bf16.msra.mxu0 %v627
      %796 = vmatprep.subr.bf16.mxu0 0
      %797 = vmatpush2.bf16.msra.mxu0 %v642
      %798 = vmatprep.subr.bf16.mxu0 0
      %799 = vmatpush2.bf16.msra.mxu0 %v641
      %800 = vmatprep.subr.bf16.mxu0 0
      %801 = vmatpush2.bf16.msra.mxu0 %v640
      %802 = vmatprep.subr.bf16.mxu0 0
      %803 = vmatpush2.bf16.msra.mxu0 %v639
      %804 = vmatprep.subr.bf16.mxu0 0
      %805 = vmatpush2.bf16.msra.mxu0 %v638
      %806 = vmatprep.subr.bf16.mxu0 0
      %807 = vmatpush2.bf16.msra.mxu0 %v637
      %808 = vmatprep.subr.bf16.mxu0 0
      %809 = vmatpush2.bf16.msra.mxu0 %v636
      %810 = vmatprep.subr.bf16.mxu0 0
      %811 = vmatpush2.bf16.msra.mxu0 %v635
      %812 = vmatprep.mubr.bf16.mxu0 %v342
      %813 = vmatmul.mubr.bf16.gmra.mxu0 %v341
      %v814 = vpop.f32.mrf.mxu0
      %v815 = vadd.f32 %v774, %v814
      %v816 = vpop.f32.mrf.mxu0
      %v817 = vpop.f32.mrf.mxu0
      %v818 = vadd.f32 %v777, %v817
      %v819 = vpop.f32.mrf.mxu0
      %820 = vdwg.mxu0
      %821 = vmatprep.subr.bf16.mxu0 0
      %822 = vmatpush1.bf16.msra.mxu0 %v650
      %823 = vmatprep.subr.bf16.mxu0 0
      %824 = vmatpush1.bf16.msra.mxu0 %v649
      %825 = vmatprep.subr.bf16.mxu0 0
      %826 = vmatpush1.bf16.msra.mxu0 %v648
      %827 = vmatprep.subr.bf16.mxu0 0
      %828 = vmatpush1.bf16.msra.mxu0 %v647
      %829 = vmatprep.subr.bf16.mxu0 0
      %830 = vmatpush1.bf16.msra.mxu0 %v646
      %831 = vmatprep.subr.bf16.mxu0 0
      %832 = vmatpush1.bf16.msra.mxu0 %v645
      %833 = vmatprep.subr.bf16.mxu0 0
      %834 = vmatpush1.bf16.msra.mxu0 %v644
      %835 = vmatprep.subr.bf16.mxu0 0
      %836 = vmatpush1.bf16.msra.mxu0 %v643
      %837 = vmatprep.subr.bf16.mxu0 0
      %838 = vmatpush2.bf16.msra.mxu0 %v658
      %839 = vmatprep.subr.bf16.mxu0 0
      %840 = vmatpush2.bf16.msra.mxu0 %v657
      %841 = vmatprep.subr.bf16.mxu0 0
      %842 = vmatpush2.bf16.msra.mxu0 %v656
      %843 = vmatprep.subr.bf16.mxu0 0
      %844 = vmatpush2.bf16.msra.mxu0 %v655
      %845 = vmatprep.subr.bf16.mxu0 0
      %846 = vmatpush2.bf16.msra.mxu0 %v654
      %847 = vmatprep.subr.bf16.mxu0 0
      %848 = vmatpush2.bf16.msra.mxu0 %v653
      %849 = vmatprep.subr.bf16.mxu0 0
      %850 = vmatpush2.bf16.msra.mxu0 %v652
      %851 = vmatprep.subr.bf16.mxu0 0
      %852 = vmatpush2.bf16.msra.mxu0 %v651
      %853 = vmatprep.mubr.bf16.mxu0 %v344
      %854 = vmatmul.mubr.bf16.gmra.mxu0 %v343
      %v855 = vpop.f32.mrf.mxu0
      %v856 = vadd.f32 %v815, %v855
      %v857 = vpop.f32.mrf.mxu0
      %v858 = vpop.f32.mrf.mxu0
      %v859 = vadd.f32 %v818, %v858
      %v860 = vpop.f32.mrf.mxu0
      %861 = vdwg.mxu0
      %862 = vmatprep.subr.bf16.mxu0 0
      %863 = vmatpush1.bf16.msra.mxu0 %v666
      %864 = vmatprep.subr.bf16.mxu0 0
      %865 = vmatpush1.bf16.msra.mxu0 %v665
      %866 = vmatprep.subr.bf16.mxu0 0
      %867 = vmatpush1.bf16.msra.mxu0 %v664
      %868 = vmatprep.subr.bf16.mxu0 0
      %869 = vmatpush1.bf16.msra.mxu0 %v663
      %870 = vmatprep.subr.bf16.mxu0 0
      %871 = vmatpush1.bf16.msra.mxu0 %v662
      %872 = vmatprep.subr.bf16.mxu0 0
      %873 = vmatpush1.bf16.msra.mxu0 %v661
      %874 = vmatprep.subr.bf16.mxu0 0
      %875 = vmatpush1.bf16.msra.mxu0 %v660
      %876 = vmatprep.subr.bf16.mxu0 0
      %877 = vmatpush1.bf16.msra.mxu0 %v659
      %878 = vmatprep.subr.bf16.mxu0 0
      %879 = vmatpush2.bf16.msra.mxu0 %v674
      %880 = vmatprep.subr.bf16.mxu0 0
      %881 = vmatpush2.bf16.msra.mxu0 %v673
      %882 = vmatprep.subr.bf16.mxu0 0
      %883 = vmatpush2.bf16.msra.mxu0 %v672
      %884 = vmatprep.subr.bf16.mxu0 0
      %885 = vmatpush2.bf16.msra.mxu0 %v671
      %886 = vmatprep.subr.bf16.mxu0 0
      %887 = vmatpush2.bf16.msra.mxu0 %v670
      %888 = vmatprep.subr.bf16.mxu0 0
      %889 = vmatpush2.bf16.msra.mxu0 %v669
      %890 = vmatprep.subr.bf16.mxu0 0
      %891 = vmatpush2.bf16.msra.mxu0 %v668
      %892 = vmatprep.subr.bf16.mxu0 0
      %893 = vmatpush2.bf16.msra.mxu0 %v667
      %894 = vmatprep.mubr.bf16.mxu0 %v346
      %895 = vmatmul.mubr.bf16.gmra.mxu0 %v345
      %v896 = vpop.f32.mrf.mxu0
      %v897 = vadd.f32 %v856, %v896
      %v898 = vpop.f32.mrf.mxu0
      %v899 = vpop.f32.mrf.mxu0
      %v900 = vadd.f32 %v859, %v899
      %v901 = vpop.f32.mrf.mxu0
      %902 = vdwg.mxu0
      %903 = vst [vmem:[%s170] sm:$0xff] %v897
      %904 = vst [vmem:[%s170 + $0x8] sm:$0x1] %v900
      %p905 = scmp.lt.s32.totalorder %s14, 1
      %s906 = scalar_select %p905, %s14, 1
      %s907 = smul.addr %s906, 2
      %s908 = smul.addr %s907, 8
      %s909 = scalar_lea.vmem %s3, %s908
      // Predicated region
      $region33: #{patch_dis_net_forward.9} parent=31 // pred_check
        %p910 = pneg %p100
      $region34: #{patch_dis_net_forward.9} parent=31 // pred_check_branch
        %912 = sbr.rel (%p910) target = $region36
      $region35: #{patch_dis_net_forward.9} parent=31 // pred_region
        _
      $region36: #{patch_dis_net_forward.9} parent=31 // pred_fallthru
        _
    $region32: #{patch_dis_net_forward.9} parent=5 // pred_fallthru
      _
    %p913 = scmp.le.s32.totalorder 2, %s9
    // Predicated region
    $region37: #{patch_dis_net_forward.9} parent=5 // pred_check
      %p914 = pneg %p913
    $region38: #{patch_dis_net_forward.9} parent=5 // pred_check_branch
      %916 = sbr.rel (%p914) target = $region40
    $region39: #{patch_dis_net_forward.9} parent=5 // pred_region
      %s917 = ssub.s32 %s9, 2
      // Predicated region
      $region41: #{patch_dis_net_forward.9} parent=39 // pred_check
        %p918 = pneg %p106
      $region42: #{patch_dis_net_forward.9} parent=39 // pred_check_branch
        %920 = sbr.rel (%p918) target = $region44
      $region43: #{patch_dis_net_forward.9} parent=39 // pred_region
        %p921 = scmp.lt.s32.totalorder %s15, 1
        %s922 = scalar_select %p921, %s15, 1
        %s923 = smul.addr %s922, 2
        %s924 = smul.addr %s923, 8
        %s925 = scalar_lea.vmem %s3, %s924
      $region44: #{patch_dis_net_forward.9} parent=39 // pred_fallthru
        _
    $region40: #{patch_dis_net_forward.9} parent=5 // pred_fallthru
      _
  $region6: #{patch_dis_net_forward.9} parent=0 // loop_footer
    %s13 = sadd.s32 1, %s9
  $region7: #{patch_dis_net_forward.9} parent=0 // loop_footer_branch
    %8 = sbr.rel target = $region3
  $region8: #{patch_dis_net_forward.9} parent=0 // loop_exit
    _

</llo_original>
